<compile_context>
chip_gen: v6e
topology: v6e:2x2x1
jax: 0.10.0
libtpu: 0.0.40
codegen_flags: <defaults>
</compile_context>

<pallas_src>
import functools

import jax
import jax.numpy as jnp
from jax import lax
from jax.experimental import pallas as pl
from jax.experimental.pallas import tpu as pltpu


def _round_up(x, m):
    return (x + m - 1) // m * m


def _pad_gate_cols(w, H, Hp):
    """(rows, 4H) with PyTorch gate order [i,f,g,o] -> (rows, 4Hp), each gate 128-aligned."""
    rows = w.shape[0]
    out = jnp.zeros((rows, 4 * Hp), w.dtype)
    for g in range(4):
        out = out.at[:, g * Hp:g * Hp + H].set(w[:, g * H:(g + 1) * H])
    return out


def lstm_tag_kernel(emb_ref, len_ref, w_ih_ref, w_hh_ref, b_ref,
                    fc_w_ref, fc_b_ref, out_ref, pre_scr, h_scr, c_scr):
    """One grid step = one (batch block, time chunk).

    emb_ref:  (1, TC*BB, E)   compute dtype (bf16), rows ordered [t-in-chunk, b-in-block]
    len_ref:  (BB, 1)         int32 valid length per batch row
    w_ih_ref: (E, 4*Hp)       compute dtype, gate order [i, f, g, o], each gate Hp wide
    w_hh_ref: (Hp, 4*Hp)      compute dtype
    b_ref:    (1, 4*Hp)       f32 (b_ih + b_hh)
    fc_w_ref: (Hp, Op)        compute dtype
    fc_b_ref: (1, Op)         f32
    out_ref:  (BB, Op)        f32
    pre_scr:  (TC*BB, 4*Hp)   f32   hoisted input projection for the chunk
    h_scr/c_scr: (BB, Hp)     f32   recurrent state, carried across time chunks
    """
    c_idx = pl.program_id(1)
    nc = pl.num_programs(1)
    BB, Hp = h_scr.shape
    TC = pre_scr.shape[0] // BB

    @pl.when(c_idx == 0)
    def _():
        h_scr[...] = jnp.zeros_like(h_scr)
        c_scr[...] = jnp.zeros_like(c_scr)

    # Hoisted input projection: one big MXU matmul per chunk, bias folded in.
    x = emb_ref[0]                                   # (TC*BB, E)
    pre_scr[...] = (jnp.dot(x, w_ih_ref[...],
                            preferred_element_type=jnp.float32)
                    + b_ref[...])

    lengths = len_ref[...]                           # (BB, 1) int32
    t0 = c_idx * TC

    def step(i, carry):
        h = h_scr[...]
        c = c_scr[...]
        row = pl.multiple_of(i * BB, BB)             # sublane-aligned dynamic slice
        gates = pre_scr[pl.ds(row, BB), :] + jnp.dot(
            h.astype(w_hh_ref.dtype), w_hh_ref[...],
            preferred_element_type=jnp.float32)      # (BB, 4*Hp)
        i_g = jax.nn.sigmoid(gates[:, 0 * Hp:1 * Hp])
        f_g = jax.nn.sigmoid(gates[:, 1 * Hp:2 * Hp])
        g_g = jnp.tanh(gates[:, 2 * Hp:3 * Hp])
        o_g = jax.nn.sigmoid(gates[:, 3 * Hp:4 * Hp])
        c_new = f_g * c + i_g * g_g
        h_new = o_g * jnp.tanh(c_new)
        valid = (t0 + i) < lengths                   # pack_padded: freeze past length
        h_scr[...] = jnp.where(valid, h_new, h)
        c_scr[...] = jnp.where(valid, c_new, c)
        return carry

    # Unrolled so the recurrence's MXU push of step t overlaps step t-1's EUP/VPU work.
    lax.fori_loop(0, TC, step, 0, unroll=True)

    @pl.when(c_idx == nc - 1)
    def _():
        out_ref[...] = (jnp.dot(h_scr[...].astype(fc_w_ref.dtype), fc_w_ref[...],
                                preferred_element_type=jnp.float32)
                        + fc_b_ref[...])


def tagging_forward(text, text_lengths, params, *, chunk_t=8,
                    compute_dtype=jnp.bfloat16):
    """Equivalent of TaggingModel.forward(text, text_lengths).

    text: (T, B) int32 token ids (time-major, like nn.LSTM with batch_first=False)
    text_lengths: (B,) valid lengths
    """
    emb_table, w_ih, w_hh, b, fc_w, fc_b = params
    T, B = text.shape
    E = emb_table.shape[1]
    H = w_hh.shape[0]
    O = fc_w.shape[1]

    # Lane/sublane-aligned padded sizes (zero padding -> identical math).
    Hp = _round_up(H, 128)
    Op = _round_up(O, 128)
    Bp = _round_up(B, 8)
    TC = min(chunk_t, T)
    Tp = _round_up(T, TC)
    nc = Tp // TC
    BB = Bp                    # one batch block here; split further for multi-TC chips
    nb = Bp // BB

    # --- glue: embedding gather + layout plumbing (plain JAX / XLA) ---------------
    embedded = emb_table[text].astype(compute_dtype)             # (T, B, E)
    emb_p = jnp.zeros((Tp, Bp, E), compute_dtype).at[:T, :B, :].set(embedded)
    # rows within a (batch block, chunk) slab ordered [t-in-chunk, b-in-block]
    emb_p = emb_p.reshape(nc, TC, nb, BB, E).transpose(2, 0, 1, 3, 4)
    emb_flat = emb_p.reshape(nb, nc * TC * BB, E)                # (nb, nc*TC*BB, E)

    len_p = jnp.zeros((Bp, 1), jnp.int32).at[:B, 0].set(
        text_lengths.astype(jnp.int32))                          # padded rows: length 0

    # --- weights: per-gate 128-lane-aligned padding, bf16 for the MXU -------------
    w_ih_p = _pad_gate_cols(w_ih.astype(jnp.float32), H, Hp).astype(compute_dtype)
    w_hh_p = jnp.zeros((Hp, 4 * Hp), jnp.float32).at[:H, :].set(
        _pad_gate_cols(w_hh.astype(jnp.float32), H, Hp)).astype(compute_dtype)
    b_p = _pad_gate_cols(b.astype(jnp.float32), H, Hp)           # f32 (1, 4Hp)
    fc_w_p = jnp.zeros((Hp, Op), jnp.float32).at[:H, :O].set(
        fc_w.astype(jnp.float32)).astype(compute_dtype)
    fc_b_p = jnp.zeros((1, Op), jnp.float32).at[:, :O].set(fc_b.astype(jnp.float32))

    out_p = pl.pallas_call(
        lstm_tag_kernel,
        out_shape=jax.ShapeDtypeStruct((Bp, Op), jnp.float32),
        grid=(nb, nc),
        in_specs=[
            pl.BlockSpec((1, TC * BB, E), lambda bb, c: (bb, c, 0)),   # streamed chunk
            pl.BlockSpec((BB, 1), lambda bb, c: (bb, 0)),
            pl.BlockSpec((E, 4 * Hp), lambda bb, c: (0, 0)),
            pl.BlockSpec((Hp, 4 * Hp), lambda bb, c: (0, 0)),
            pl.BlockSpec((1, 4 * Hp), lambda bb, c: (0, 0)),
            pl.BlockSpec((Hp, Op), lambda bb, c: (0, 0)),
            pl.BlockSpec((1, Op), lambda bb, c: (0, 0)),
        ],
        out_specs=pl.BlockSpec((BB, Op), lambda bb, c: (bb, 0)),
        scratch_shapes=[
            pltpu.VMEM((TC * BB, 4 * Hp), jnp.float32),   # hoisted input projection
            pltpu.VMEM((BB, Hp), jnp.float32),            # h
            pltpu.VMEM((BB, Hp), jnp.float32),            # c
        ],
        compiler_params=pltpu.CompilerParams(
            dimension_semantics=("parallel", "arbitrary"),
            vmem_limit_bytes=32 * 1024 * 1024),
    )(emb_flat, len_p, w_ih_p, w_hh_p, b_p, fc_w_p, fc_b_p)

    return out_p[:B, :O]


def tagging_forward_ref(text, text_lengths, params):
    """Pure-JAX f32 reference for correctness checking."""
    emb_table, w_ih, w_hh, b, fc_w, fc_b = params
    embedded = emb_table[text]                  # (T, B, E)
    T, B, _ = embedded.shape
    H = w_hh.shape[0]
    lengths = text_lengths.astype(jnp.int32).reshape(B, 1)

    def step(carry, inp):
        h, c = carry
        x_t, t = inp
        gates = x_t @ w_ih + h @ w_hh + b
        i_g = jax.nn.sigmoid(gates[:, 0 * H:1 * H])
        f_g = jax.nn.sigmoid(gates[:, 1 * H:2 * H])
        g_g = jnp.tanh(gates[:, 2 * H:3 * H])
        o_g = jax.nn.sigmoid(gates[:, 3 * H:4 * H])
        c_new = f_g * c + i_g * g_g
        h_new = o_g * jnp.tanh(c_new)
        valid = t < lengths
        return (jnp.where(valid, h_new, h), jnp.where(valid, c_new, c)), None

    init = (jnp.zeros((B, H), jnp.float32), jnp.zeros((B, H), jnp.float32))
    (h, _), _ = lax.scan(step, init, (embedded, jnp.arange(T)))
    return h @ fc_w + fc_b


def init_params(key, input_dim, embedding_dim, hidden_dim, output_dim):
    """Deterministic parameter init matching PyTorch layer shapes.

    nn.Embedding(input_dim, embedding_dim)  ~ N(0, 1)
    nn.LSTM(embedding_dim, hidden_dim)      ~ U(-1/sqrt(H), 1/sqrt(H))
    nn.Linear(hidden_dim, output_dim)       ~ U(-1/sqrt(H), 1/sqrt(H))
    Gate ordering follows PyTorch: [input, forget, cell(g), output].
    Weights stored transposed relative to PyTorch (x @ W form).
    """
    k = 1.0 / jnp.sqrt(hidden_dim)
    keys = jax.random.split(key, 7)
    emb_table = jax.random.normal(keys[0], (input_dim, embedding_dim), jnp.float32)
    w_ih = jax.random.uniform(keys[1], (embedding_dim, 4 * hidden_dim),
                              jnp.float32, -k, k)
    w_hh = jax.random.uniform(keys[2], (hidden_dim, 4 * hidden_dim),
                              jnp.float32, -k, k)
    b_ih = jax.random.uniform(keys[3], (1, 4 * hidden_dim), jnp.float32, -k, k)
    b_hh = jax.random.uniform(keys[4], (1, 4 * hidden_dim), jnp.float32, -k, k)
    b = b_ih + b_hh
    fc_w = jax.random.uniform(keys[5], (hidden_dim, output_dim),
                              jnp.float32, -k, k)
    fc_b = jax.random.uniform(keys[6], (1, output_dim), jnp.float32, -k, k)
    return (emb_table, w_ih, w_hh, b, fc_w, fc_b)


if __name__ == "__main__":
    INPUT_DIM = 50       # vocab size
    EMBEDDING_DIM = 32
    HIDDEN_DIM = 32
    OUTPUT_DIM = 16
    T, B = 8, 4

    key = jax.random.PRNGKey(0)
    k_param, k_text = jax.random.split(key)
    params = init_params(k_param, INPUT_DIM, EMBEDDING_DIM, HIDDEN_DIM, OUTPUT_DIM)

    # (T, B) token ids; lengths sorted descending (enforce_sorted=True semantics).
    text = jax.random.randint(k_text, (T, B), 0, INPUT_DIM, dtype=jnp.int32)
    text_lengths = jnp.array([8, 6, 5, 3], dtype=jnp.int32)

    # chunk_t=4 -> 2 time chunks: exercises the streamed-chunk grid and h/c carry.
    out = tagging_forward(text, text_lengths, params, chunk_t=4,
                          compute_dtype=jnp.bfloat16)
    out = jax.block_until_ready(out)

    ref = tagging_forward_ref(text, text_lengths, params)
    assert out.shape == (B, OUTPUT_DIM)
    # bf16 MXU inputs (f32 accumulate) vs f32 reference -> loosened tolerance.
    assert jnp.allclose(out, ref, atol=5e-2, rtol=5e-2), "mismatch vs reference"

    print("KERNEL_OK")
</pallas_src>

<mosaic_0001>
module attributes {stable_mosaic.version = 11 : i64} {
  func.func @lstm_tag_kernel(%arg0: i32, %arg1: i32, %arg2: memref<1x32x32xbf16, #tpu.memory_space<vmem>>, %arg3: memref<8x1xi32, #tpu.memory_space<vmem>>, %arg4: memref<32x512xbf16, #tpu.memory_space<vmem>>, %arg5: memref<128x512xbf16, #tpu.memory_space<vmem>>, %arg6: memref<1x512xf32, #tpu.memory_space<vmem>>, %arg7: memref<128x128xbf16, #tpu.memory_space<vmem>>, %arg8: memref<1x128xf32, #tpu.memory_space<vmem>>, %arg9: memref<8x128xf32, #tpu.memory_space<vmem>>, %arg10: memref<32x512xf32, #tpu.memory_space<vmem>>, %arg11: memref<8x128xf32, #tpu.memory_space<vmem>>, %arg12: memref<8x128xf32, #tpu.memory_space<vmem>>) attributes {dimension_semantics = [#tpu.dimension_semantics<parallel>, #tpu.dimension_semantics<arbitrary>], iteration_bounds = array<i64: 1, 2>, scalar_prefetch = 0 : i64, scratch_operands = 3 : i64, tpu.core_type = #tpu.core_type<tc>, window_params = [{transform_indices = @transform_0, window_bounds = array<i64: 1, 32, 32>}, {transform_indices = @transform_1, window_bounds = array<i64: 8, 1>}, {pipeline_mode = #tpu.pipeline_mode<synchronous>, transform_indices = @transform_2, window_bounds = array<i64: 32, 512>}, {pipeline_mode = #tpu.pipeline_mode<synchronous>, transform_indices = @transform_3, window_bounds = array<i64: 128, 512>}, {pipeline_mode = #tpu.pipeline_mode<synchronous>, transform_indices = @transform_4, window_bounds = array<i64: 1, 512>}, {pipeline_mode = #tpu.pipeline_mode<synchronous>, transform_indices = @transform_5, window_bounds = array<i64: 128, 128>}, {pipeline_mode = #tpu.pipeline_mode<synchronous>, transform_indices = @transform_6, window_bounds = array<i64: 1, 128>}, {transform_indices = @transform_7, window_bounds = array<i64: 8, 128>}]} {
    %c0_i32 = arith.constant 0 : i32
    %0 = arith.cmpi eq, %arg1, %c0_i32 : i32
    %1 = arith.extui %0 : i1 to i32
    %c0_i32_0 = arith.constant 0 : i32
    %2 = arith.cmpi ne, %1, %c0_i32_0 : i32
    scf.if %2 {
      %cst_78 = arith.constant 0.000000e+00 : f32
      %200 = vector.broadcast %cst_78 : f32 to vector<8x128xf32>
      %c0_79 = arith.constant 0 : index
      %c0_80 = arith.constant 0 : index
      %201 = vector.load %arg11[%c0_79, %c0_80] : memref<8x128xf32, #tpu.memory_space<vmem>>, vector<8x128xf32>
      tpu.vector_store %arg11[%c0_79, %c0_80], %200 {strides = array<i32>} : memref<8x128xf32, #tpu.memory_space<vmem>>, vector<8x128xf32>,
      %cst_81 = arith.constant 0.000000e+00 : f32
      %202 = vector.broadcast %cst_81 : f32 to vector<8x128xf32>
      %c0_82 = arith.constant 0 : index
      %c0_83 = arith.constant 0 : index
      %203 = vector.load %arg12[%c0_82, %c0_83] : memref<8x128xf32, #tpu.memory_space<vmem>>, vector<8x128xf32>
      tpu.vector_store %arg12[%c0_82, %c0_83], %202 {strides = array<i32>} : memref<8x128xf32, #tpu.memory_space<vmem>>, vector<8x128xf32>,
    } else {
    }
    %c0 = arith.constant 0 : index
    %c0_1 = arith.constant 0 : index
    %c0_2 = arith.constant 0 : index
    %3 = vector.load %arg2[%c0, %c0_1, %c0_2] : memref<1x32x32xbf16, #tpu.memory_space<vmem>>, vector<1x32x32xbf16>
    %4 = vector.shape_cast %3 : vector<1x32x32xbf16> to vector<32x32xbf16>
    %c0_3 = arith.constant 0 : index
    %c0_4 = arith.constant 0 : index
    %5 = vector.load %arg4[%c0_3, %c0_4] : memref<32x512xbf16, #tpu.memory_space<vmem>>, vector<32x512xbf16>
    %cst = arith.constant dense<0.000000e+00> : vector<32x512xf32>
    %6 = tpu.matmul %4, %5, %cst {dimension_numbers = #tpu.dot_dimension_numbers<[1], [0], [0], [1], [0, 0, 1, 1], [], []>} : vector<32x32xbf16>, vector<32x512xbf16>, vector<32x512xf32> -> vector<32x512xf32>
    %c0_5 = arith.constant 0 : index
    %c0_6 = arith.constant 0 : index
    %7 = vector.load %arg6[%c0_5, %c0_6] : memref<1x512xf32, #tpu.memory_space<vmem>>, vector<1x512xf32>
    %8 = vector.broadcast %7 : vector<1x512xf32> to vector<32x512xf32>
    %9 = arith.addf %6, %8 : vector<32x512xf32>
    %c0_7 = arith.constant 0 : index
    %c0_8 = arith.constant 0 : index
    %10 = vector.load %arg10[%c0_7, %c0_8] : memref<32x512xf32, #tpu.memory_space<vmem>>, vector<32x512xf32>
    tpu.vector_store %arg10[%c0_7, %c0_8], %9 {strides = array<i32>} : memref<32x512xf32, #tpu.memory_space<vmem>>, vector<32x512xf32>,
    %c0_9 = arith.constant 0 : index
    %c0_10 = arith.constant 0 : index
    %11 = vector.load %arg3[%c0_9, %c0_10] : memref<8x1xi32, #tpu.memory_space<vmem>>, vector<8x1xi32>
    %c4_i32 = arith.constant 4 : i32
    %12 = arith.muli %arg1, %c4_i32 : i32
    %c0_i32_11 = arith.constant 0 : i32
    %c0_12 = arith.constant 0 : index
    %c0_13 = arith.constant 0 : index
    %13 = vector.load %arg11[%c0_12, %c0_13] : memref<8x128xf32, #tpu.memory_space<vmem>>, vector<8x128xf32>
    %c0_14 = arith.constant 0 : index
    %c0_15 = arith.constant 0 : index
    %14 = vector.load %arg12[%c0_14, %c0_15] : memref<8x128xf32, #tpu.memory_space<vmem>>, vector<8x128xf32>
    %c8_i32 = arith.constant 8 : i32
    %15 = arith.muli %c0_i32_11, %c8_i32 : i32
    %16 = tpu.assume_multiple %15, 8 : i32
    %17 = arith.index_cast %16 : i32 to index
    %c0_16 = arith.constant 0 : index
    %18 = vector.load %arg10[%17, %c0_16] : memref<32x512xf32, #tpu.memory_space<vmem>>, vector<8x512xf32>
    %19 = arith.truncf %13 : vector<8x128xf32> to vector<8x128xbf16>
    %c0_17 = arith.constant 0 : index
    %c0_18 = arith.constant 0 : index
    %20 = vector.load %arg5[%c0_17, %c0_18] : memref<128x512xbf16, #tpu.memory_space<vmem>>, vector<128x512xbf16>
    %cst_19 = arith.constant dense<0.000000e+00> : vector<8x512xf32>
    %21 = tpu.matmul %19, %20, %cst_19 {dimension_numbers = #tpu.dot_dimension_numbers<[1], [0], [0], [1], [0, 0, 1, 1], [], []>} : vector<8x128xbf16>, vector<128x512xbf16>, vector<8x512xf32> -> vector<8x512xf32>
    %22 = arith.addf %18, %21 : vector<8x512xf32>
    %23 = vector.extract_strided_slice %22 {offsets = [0, 0], sizes = [8, 128], strides = [1, 1]} : vector<8x512xf32> to vector<8x128xf32>
    %24 = arith.negf %23 : vector<8x128xf32>
    %25 = math.exp %24 : vector<8x128xf32>
    %cst_20 = arith.constant 1.000000e+00 : f32
    %26 = vector.broadcast %cst_20 : f32 to vector<8x128xf32>
    %27 = arith.addf %26, %25 : vector<8x128xf32>
    %28 = arith.divf %26, %27 : vector<8x128xf32>
    %29 = vector.extract_strided_slice %22 {offsets = [0, 128], sizes = [8, 128], strides = [1, 1]} : vector<8x512xf32> to vector<8x128xf32>
    %30 = arith.negf %29 : vector<8x128xf32>
    %31 = math.exp %30 : vector<8x128xf32>
    %cst_21 = arith.constant 1.000000e+00 : f32
    %32 = vector.broadcast %cst_21 : f32 to vector<8x128xf32>
    %33 = arith.addf %32, %31 : vector<8x128xf32>
    %34 = arith.divf %32, %33 : vector<8x128xf32>
    %35 = vector.extract_strided_slice %22 {offsets = [0, 256], sizes = [8, 128], strides = [1, 1]} : vector<8x512xf32> to vector<8x128xf32>
    %36 = math.tanh %35 : vector<8x128xf32>
    %37 = vector.extract_strided_slice %22 {offsets = [0, 384], sizes = [8, 128], strides = [1, 1]} : vector<8x512xf32> to vector<8x128xf32>
    %38 = arith.negf %37 : vector<8x128xf32>
    %39 = math.exp %38 : vector<8x128xf32>
    %cst_22 = arith.constant 1.000000e+00 : f32
    %40 = vector.broadcast %cst_22 : f32 to vector<8x128xf32>
    %41 = arith.addf %40, %39 : vector<8x128xf32>
    %42 = arith.divf %40, %41 : vector<8x128xf32>
    %43 = arith.mulf %34, %14 : vector<8x128xf32>
    %44 = arith.mulf %28, %36 : vector<8x128xf32>
    %45 = arith.addf %43, %44 : vector<8x128xf32>
    %46 = math.tanh %45 : vector<8x128xf32>
    %47 = arith.mulf %42, %46 : vector<8x128xf32>
    %48 = arith.addi %12, %c0_i32_11 : i32
    %49 = vector.broadcast %48 : i32 to vector<8x1xi32>
    %50 = arith.cmpi slt, %49, %11 : vector<8x1xi32>
    %51 = vector.shape_cast %50 : vector<8x1xi1> to vector<8x1xi1>
    %52 = vector.broadcast %51 : vector<8x1xi1> to vector<8x128xi1>
    %53 = arith.select %52, %47, %13 : vector<8x128xi1>, vector<8x128xf32>
    %c0_23 = arith.constant 0 : index
    %c0_24 = arith.constant 0 : index
    %54 = vector.load %arg11[%c0_23, %c0_24] : memref<8x128xf32, #tpu.memory_space<vmem>>, vector<8x128xf32>
    tpu.vector_store %arg11[%c0_23, %c0_24], %53 {strides = array<i32>} : memref<8x128xf32, #tpu.memory_space<vmem>>, vector<8x128xf32>,
    %55 = vector.shape_cast %50 : vector<8x1xi1> to vector<8x1xi1>
    %56 = vector.broadcast %55 : vector<8x1xi1> to vector<8x128xi1>
    %57 = arith.select %56, %45, %14 : vector<8x128xi1>, vector<8x128xf32>
    %c0_25 = arith.constant 0 : index
    %c0_26 = arith.constant 0 : index
    %58 = vector.load %arg12[%c0_25, %c0_26] : memref<8x128xf32, #tpu.memory_space<vmem>>, vector<8x128xf32>
    tpu.vector_store %arg12[%c0_25, %c0_26], %57 {strides = array<i32>} : memref<8x128xf32, #tpu.memory_space<vmem>>, vector<8x128xf32>,
    %c1_i32 = arith.constant 1 : i32
    %c0_27 = arith.constant 0 : index
    %c0_28 = arith.constant 0 : index
    %59 = vector.load %arg11[%c0_27, %c0_28] : memref<8x128xf32, #tpu.memory_space<vmem>>, vector<8x128xf32>
    %c0_29 = arith.constant 0 : index
    %c0_30 = arith.constant 0 : index
    %60 = vector.load %arg12[%c0_29, %c0_30] : memref<8x128xf32, #tpu.memory_space<vmem>>, vector<8x128xf32>
    %c8_i32_31 = arith.constant 8 : i32
    %61 = arith.muli %c1_i32, %c8_i32_31 : i32
    %62 = tpu.assume_multiple %61, 8 : i32
    %63 = arith.index_cast %62 : i32 to index
    %c0_32 = arith.constant 0 : index
    %64 = vector.load %arg10[%63, %c0_32] : memref<32x512xf32, #tpu.memory_space<vmem>>, vector<8x512xf32>
    %65 = arith.truncf %59 : vector<8x128xf32> to vector<8x128xbf16>
    %c0_33 = arith.constant 0 : index
    %c0_34 = arith.constant 0 : index
    %66 = vector.load %arg5[%c0_33, %c0_34] : memref<128x512xbf16, #tpu.memory_space<vmem>>, vector<128x512xbf16>
    %cst_35 = arith.constant dense<0.000000e+00> : vector<8x512xf32>
    %67 = tpu.matmul %65, %66, %cst_35 {dimension_numbers = #tpu.dot_dimension_numbers<[1], [0], [0], [1], [0, 0, 1, 1], [], []>} : vector<8x128xbf16>, vector<128x512xbf16>, vector<8x512xf32> -> vector<8x512xf32>
    %68 = arith.addf %64, %67 : vector<8x512xf32>
    %69 = vector.extract_strided_slice %68 {offsets = [0, 0], sizes = [8, 128], strides = [1, 1]} : vector<8x512xf32> to vector<8x128xf32>
    %70 = arith.negf %69 : vector<8x128xf32>
    %71 = math.exp %70 : vector<8x128xf32>
    %cst_36 = arith.constant 1.000000e+00 : f32
    %72 = vector.broadcast %cst_36 : f32 to vector<8x128xf32>
    %73 = arith.addf %72, %71 : vector<8x128xf32>
    %74 = arith.divf %72, %73 : vector<8x128xf32>
    %75 = vector.extract_strided_slice %68 {offsets = [0, 128], sizes = [8, 128], strides = [1, 1]} : vector<8x512xf32> to vector<8x128xf32>
    %76 = arith.negf %75 : vector<8x128xf32>
    %77 = math.exp %76 : vector<8x128xf32>
    %cst_37 = arith.constant 1.000000e+00 : f32
    %78 = vector.broadcast %cst_37 : f32 to vector<8x128xf32>
    %79 = arith.addf %78, %77 : vector<8x128xf32>
    %80 = arith.divf %78, %79 : vector<8x128xf32>
    %81 = vector.extract_strided_slice %68 {offsets = [0, 256], sizes = [8, 128], strides = [1, 1]} : vector<8x512xf32> to vector<8x128xf32>
    %82 = math.tanh %81 : vector<8x128xf32>
    %83 = vector.extract_strided_slice %68 {offsets = [0, 384], sizes = [8, 128], strides = [1, 1]} : vector<8x512xf32> to vector<8x128xf32>
    %84 = arith.negf %83 : vector<8x128xf32>
    %85 = math.exp %84 : vector<8x128xf32>
    %cst_38 = arith.constant 1.000000e+00 : f32
    %86 = vector.broadcast %cst_38 : f32 to vector<8x128xf32>
    %87 = arith.addf %86, %85 : vector<8x128xf32>
    %88 = arith.divf %86, %87 : vector<8x128xf32>
    %89 = arith.mulf %80, %60 : vector<8x128xf32>
    %90 = arith.mulf %74, %82 : vector<8x128xf32>
    %91 = arith.addf %89, %90 : vector<8x128xf32>
    %92 = math.tanh %91 : vector<8x128xf32>
    %93 = arith.mulf %88, %92 : vector<8x128xf32>
    %94 = arith.addi %12, %c1_i32 : i32
    %95 = vector.broadcast %94 : i32 to vector<8x1xi32>
    %96 = arith.cmpi slt, %95, %11 : vector<8x1xi32>
    %97 = vector.shape_cast %96 : vector<8x1xi1> to vector<8x1xi1>
    %98 = vector.broadcast %97 : vector<8x1xi1> to vector<8x128xi1>
    %99 = arith.select %98, %93, %59 : vector<8x128xi1>, vector<8x128xf32>
    %c0_39 = arith.constant 0 : index
    %c0_40 = arith.constant 0 : index
    %100 = vector.load %arg11[%c0_39, %c0_40] : memref<8x128xf32, #tpu.memory_space<vmem>>, vector<8x128xf32>
    tpu.vector_store %arg11[%c0_39, %c0_40], %99 {strides = array<i32>} : memref<8x128xf32, #tpu.memory_space<vmem>>, vector<8x128xf32>,
    %101 = vector.shape_cast %96 : vector<8x1xi1> to vector<8x1xi1>
    %102 = vector.broadcast %101 : vector<8x1xi1> to vector<8x128xi1>
    %103 = arith.select %102, %91, %60 : vector<8x128xi1>, vector<8x128xf32>
    %c0_41 = arith.constant 0 : index
    %c0_42 = arith.constant 0 : index
    %104 = vector.load %arg12[%c0_41, %c0_42] : memref<8x128xf32, #tpu.memory_space<vmem>>, vector<8x128xf32>
    tpu.vector_store %arg12[%c0_41, %c0_42], %103 {strides = array<i32>} : memref<8x128xf32, #tpu.memory_space<vmem>>, vector<8x128xf32>,
    %c2_i32 = arith.constant 2 : i32
    %c0_43 = arith.constant 0 : index
    %c0_44 = arith.constant 0 : index
    %105 = vector.load %arg11[%c0_43, %c0_44] : memref<8x128xf32, #tpu.memory_space<vmem>>, vector<8x128xf32>
    %c0_45 = arith.constant 0 : index
    %c0_46 = arith.constant 0 : index
    %106 = vector.load %arg12[%c0_45, %c0_46] : memref<8x128xf32, #tpu.memory_space<vmem>>, vector<8x128xf32>
    %c8_i32_47 = arith.constant 8 : i32
    %107 = arith.muli %c2_i32, %c8_i32_47 : i32
    %108 = tpu.assume_multiple %107, 8 : i32
    %109 = arith.index_cast %108 : i32 to index
    %c0_48 = arith.constant 0 : index
    %110 = vector.load %arg10[%109, %c0_48] : memref<32x512xf32, #tpu.memory_space<vmem>>, vector<8x512xf32>
    %111 = arith.truncf %105 : vector<8x128xf32> to vector<8x128xbf16>
    %c0_49 = arith.constant 0 : index
    %c0_50 = arith.constant 0 : index
    %112 = vector.load %arg5[%c0_49, %c0_50] : memref<128x512xbf16, #tpu.memory_space<vmem>>, vector<128x512xbf16>
    %cst_51 = arith.constant dense<0.000000e+00> : vector<8x512xf32>
    %113 = tpu.matmul %111, %112, %cst_51 {dimension_numbers = #tpu.dot_dimension_numbers<[1], [0], [0], [1], [0, 0, 1, 1], [], []>} : vector<8x128xbf16>, vector<128x512xbf16>, vector<8x512xf32> -> vector<8x512xf32>
    %114 = arith.addf %110, %113 : vector<8x512xf32>
    %115 = vector.extract_strided_slice %114 {offsets = [0, 0], sizes = [8, 128], strides = [1, 1]} : vector<8x512xf32> to vector<8x128xf32>
    %116 = arith.negf %115 : vector<8x128xf32>
    %117 = math.exp %116 : vector<8x128xf32>
    %cst_52 = arith.constant 1.000000e+00 : f32
    %118 = vector.broadcast %cst_52 : f32 to vector<8x128xf32>
    %119 = arith.addf %118, %117 : vector<8x128xf32>
    %120 = arith.divf %118, %119 : vector<8x128xf32>
    %121 = vector.extract_strided_slice %114 {offsets = [0, 128], sizes = [8, 128], strides = [1, 1]} : vector<8x512xf32> to vector<8x128xf32>
    %122 = arith.negf %121 : vector<8x128xf32>
    %123 = math.exp %122 : vector<8x128xf32>
    %cst_53 = arith.constant 1.000000e+00 : f32
    %124 = vector.broadcast %cst_53 : f32 to vector<8x128xf32>
    %125 = arith.addf %124, %123 : vector<8x128xf32>
    %126 = arith.divf %124, %125 : vector<8x128xf32>
    %127 = vector.extract_strided_slice %114 {offsets = [0, 256], sizes = [8, 128], strides = [1, 1]} : vector<8x512xf32> to vector<8x128xf32>
    %128 = math.tanh %127 : vector<8x128xf32>
    %129 = vector.extract_strided_slice %114 {offsets = [0, 384], sizes = [8, 128], strides = [1, 1]} : vector<8x512xf32> to vector<8x128xf32>
    %130 = arith.negf %129 : vector<8x128xf32>
    %131 = math.exp %130 : vector<8x128xf32>
    %cst_54 = arith.constant 1.000000e+00 : f32
    %132 = vector.broadcast %cst_54 : f32 to vector<8x128xf32>
    %133 = arith.addf %132, %131 : vector<8x128xf32>
    %134 = arith.divf %132, %133 : vector<8x128xf32>
    %135 = arith.mulf %126, %106 : vector<8x128xf32>
    %136 = arith.mulf %120, %128 : vector<8x128xf32>
    %137 = arith.addf %135, %136 : vector<8x128xf32>
    %138 = math.tanh %137 : vector<8x128xf32>
    %139 = arith.mulf %134, %138 : vector<8x128xf32>
    %140 = arith.addi %12, %c2_i32 : i32
    %141 = vector.broadcast %140 : i32 to vector<8x1xi32>
    %142 = arith.cmpi slt, %141, %11 : vector<8x1xi32>
    %143 = vector.shape_cast %142 : vector<8x1xi1> to vector<8x1xi1>
    %144 = vector.broadcast %143 : vector<8x1xi1> to vector<8x128xi1>
    %145 = arith.select %144, %139, %105 : vector<8x128xi1>, vector<8x128xf32>
    %c0_55 = arith.constant 0 : index
    %c0_56 = arith.constant 0 : index
    %146 = vector.load %arg11[%c0_55, %c0_56] : memref<8x128xf32, #tpu.memory_space<vmem>>, vector<8x128xf32>
    tpu.vector_store %arg11[%c0_55, %c0_56], %145 {strides = array<i32>} : memref<8x128xf32, #tpu.memory_space<vmem>>, vector<8x128xf32>,
    %147 = vector.shape_cast %142 : vector<8x1xi1> to vector<8x1xi1>
    %148 = vector.broadcast %147 : vector<8x1xi1> to vector<8x128xi1>
    %149 = arith.select %148, %137, %106 : vector<8x128xi1>, vector<8x128xf32>
    %c0_57 = arith.constant 0 : index
    %c0_58 = arith.constant 0 : index
    %150 = vector.load %arg12[%c0_57, %c0_58] : memref<8x128xf32, #tpu.memory_space<vmem>>, vector<8x128xf32>
    tpu.vector_store %arg12[%c0_57, %c0_58], %149 {strides = array<i32>} : memref<8x128xf32, #tpu.memory_space<vmem>>, vector<8x128xf32>,
    %c3_i32 = arith.constant 3 : i32
    %c0_59 = arith.constant 0 : index
    %c0_60 = arith.constant 0 : index
    %151 = vector.load %arg11[%c0_59, %c0_60] : memref<8x128xf32, #tpu.memory_space<vmem>>, vector<8x128xf32>
    %c0_61 = arith.constant 0 : index
    %c0_62 = arith.constant 0 : index
    %152 = vector.load %arg12[%c0_61, %c0_62] : memref<8x128xf32, #tpu.memory_space<vmem>>, vector<8x128xf32>
    %c8_i32_63 = arith.constant 8 : i32
    %153 = arith.muli %c3_i32, %c8_i32_63 : i32
    %154 = tpu.assume_multiple %153, 8 : i32
    %155 = arith.index_cast %154 : i32 to index
    %c0_64 = arith.constant 0 : index
    %156 = vector.load %arg10[%155, %c0_64] : memref<32x512xf32, #tpu.memory_space<vmem>>, vector<8x512xf32>
    %157 = arith.truncf %151 : vector<8x128xf32> to vector<8x128xbf16>
    %c0_65 = arith.constant 0 : index
    %c0_66 = arith.constant 0 : index
    %158 = vector.load %arg5[%c0_65, %c0_66] : memref<128x512xbf16, #tpu.memory_space<vmem>>, vector<128x512xbf16>
    %cst_67 = arith.constant dense<0.000000e+00> : vector<8x512xf32>
    %159 = tpu.matmul %157, %158, %cst_67 {dimension_numbers = #tpu.dot_dimension_numbers<[1], [0], [0], [1], [0, 0, 1, 1], [], []>} : vector<8x128xbf16>, vector<128x512xbf16>, vector<8x512xf32> -> vector<8x512xf32>
    %160 = arith.addf %156, %159 : vector<8x512xf32>
    %161 = vector.extract_strided_slice %160 {offsets = [0, 0], sizes = [8, 128], strides = [1, 1]} : vector<8x512xf32> to vector<8x128xf32>
    %162 = arith.negf %161 : vector<8x128xf32>
    %163 = math.exp %162 : vector<8x128xf32>
    %cst_68 = arith.constant 1.000000e+00 : f32
    %164 = vector.broadcast %cst_68 : f32 to vector<8x128xf32>
    %165 = arith.addf %164, %163 : vector<8x128xf32>
    %166 = arith.divf %164, %165 : vector<8x128xf32>
    %167 = vector.extract_strided_slice %160 {offsets = [0, 128], sizes = [8, 128], strides = [1, 1]} : vector<8x512xf32> to vector<8x128xf32>
    %168 = arith.negf %167 : vector<8x128xf32>
    %169 = math.exp %168 : vector<8x128xf32>
    %cst_69 = arith.constant 1.000000e+00 : f32
    %170 = vector.broadcast %cst_69 : f32 to vector<8x128xf32>
    %171 = arith.addf %170, %169 : vector<8x128xf32>
    %172 = arith.divf %170, %171 : vector<8x128xf32>
    %173 = vector.extract_strided_slice %160 {offsets = [0, 256], sizes = [8, 128], strides = [1, 1]} : vector<8x512xf32> to vector<8x128xf32>
    %174 = math.tanh %173 : vector<8x128xf32>
    %175 = vector.extract_strided_slice %160 {offsets = [0, 384], sizes = [8, 128], strides = [1, 1]} : vector<8x512xf32> to vector<8x128xf32>
    %176 = arith.negf %175 : vector<8x128xf32>
    %177 = math.exp %176 : vector<8x128xf32>
    %cst_70 = arith.constant 1.000000e+00 : f32
    %178 = vector.broadcast %cst_70 : f32 to vector<8x128xf32>
    %179 = arith.addf %178, %177 : vector<8x128xf32>
    %180 = arith.divf %178, %179 : vector<8x128xf32>
    %181 = arith.mulf %172, %152 : vector<8x128xf32>
    %182 = arith.mulf %166, %174 : vector<8x128xf32>
    %183 = arith.addf %181, %182 : vector<8x128xf32>
    %184 = math.tanh %183 : vector<8x128xf32>
    %185 = arith.mulf %180, %184 : vector<8x128xf32>
    %186 = arith.addi %12, %c3_i32 : i32
    %187 = vector.broadcast %186 : i32 to vector<8x1xi32>
    %188 = arith.cmpi slt, %187, %11 : vector<8x1xi32>
    %189 = vector.shape_cast %188 : vector<8x1xi1> to vector<8x1xi1>
    %190 = vector.broadcast %189 : vector<8x1xi1> to vector<8x128xi1>
    %191 = arith.select %190, %185, %151 : vector<8x128xi1>, vector<8x128xf32>
    %c0_71 = arith.constant 0 : index
    %c0_72 = arith.constant 0 : index
    %192 = vector.load %arg11[%c0_71, %c0_72] : memref<8x128xf32, #tpu.memory_space<vmem>>, vector<8x128xf32>
    tpu.vector_store %arg11[%c0_71, %c0_72], %191 {strides = array<i32>} : memref<8x128xf32, #tpu.memory_space<vmem>>, vector<8x128xf32>,
    %193 = vector.shape_cast %188 : vector<8x1xi1> to vector<8x1xi1>
    %194 = vector.broadcast %193 : vector<8x1xi1> to vector<8x128xi1>
    %195 = arith.select %194, %183, %152 : vector<8x128xi1>, vector<8x128xf32>
    %c0_73 = arith.constant 0 : index
    %c0_74 = arith.constant 0 : index
    %196 = vector.load %arg12[%c0_73, %c0_74] : memref<8x128xf32, #tpu.memory_space<vmem>>, vector<8x128xf32>
    tpu.vector_store %arg12[%c0_73, %c0_74], %195 {strides = array<i32>} : memref<8x128xf32, #tpu.memory_space<vmem>>, vector<8x128xf32>,
    %c4_i32_75 = arith.constant 4 : i32
    %c1_i32_76 = arith.constant 1 : i32
    %197 = arith.cmpi eq, %arg1, %c1_i32_76 : i32
    %198 = arith.extui %197 : i1 to i32
    %c0_i32_77 = arith.constant 0 : i32
    %199 = arith.cmpi ne, %198, %c0_i32_77 : i32
    scf.if %199 {
      %c0_78 = arith.constant 0 : index
      %c0_79 = arith.constant 0 : index
      %200 = vector.load %arg11[%c0_78, %c0_79] : memref<8x128xf32, #tpu.memory_space<vmem>>, vector<8x128xf32>
      %201 = arith.truncf %200 : vector<8x128xf32> to vector<8x128xbf16>
      %c0_80 = arith.constant 0 : index
      %c0_81 = arith.constant 0 : index
      %202 = vector.load %arg7[%c0_80, %c0_81] : memref<128x128xbf16, #tpu.memory_space<vmem>>, vector<128x128xbf16>
      %cst_82 = arith.constant dense<0.000000e+00> : vector<8x128xf32>
      %203 = tpu.matmul %201, %202, %cst_82 {dimension_numbers = #tpu.dot_dimension_numbers<[1], [0], [0], [1], [0, 0, 1, 1], [], []>} : vector<8x128xbf16>, vector<128x128xbf16>, vector<8x128xf32> -> vector<8x128xf32>
      %c0_83 = arith.constant 0 : index
      %c0_84 = arith.constant 0 : index
      %204 = vector.load %arg8[%c0_83, %c0_84] : memref<1x128xf32, #tpu.memory_space<vmem>>, vector<1x128xf32>
      %205 = vector.broadcast %204 : vector<1x128xf32> to vector<8x128xf32>
      %206 = arith.addf %203, %205 : vector<8x128xf32>
      %c0_85 = arith.constant 0 : index
      %c0_86 = arith.constant 0 : index
      %207 = vector.load %arg9[%c0_85, %c0_86] : memref<8x128xf32, #tpu.memory_space<vmem>>, vector<8x128xf32>
      tpu.vector_store %arg9[%c0_85, %c0_86], %206 {strides = array<i32>} : memref<8x128xf32, #tpu.memory_space<vmem>>, vector<8x128xf32>,
    } else {
    }
    return
  }
  func.func @transform_0(%arg0: i32, %arg1: i32) -> (i32, i32, i32) {
    %c0_i32 = arith.constant 0 : i32
    %c0_i32_0 = arith.constant 0 : i32
    return %arg0, %arg1, %c0_i32 : i32, i32, i32
  }
  func.func @transform_1(%arg0: i32, %arg1: i32) -> (i32, i32) {
    %c0_i32 = arith.constant 0 : i32
    %c0_i32_0 = arith.constant 0 : i32
    return %arg0, %c0_i32 : i32, i32
  }
  func.func @transform_2(%arg0: i32, %arg1: i32) -> (i32, i32) {
    %c0_i32 = arith.constant 0 : i32
    %c0_i32_0 = arith.constant 0 : i32
    %c0_i32_1 = arith.constant 0 : i32
    return %c0_i32, %c0_i32_0 : i32, i32
  }
  func.func @transform_3(%arg0: i32, %arg1: i32) -> (i32, i32) {
    %c0_i32 = arith.constant 0 : i32
    %c0_i32_0 = arith.constant 0 : i32
    %c0_i32_1 = arith.constant 0 : i32
    return %c0_i32, %c0_i32_0 : i32, i32
  }
  func.func @transform_4(%arg0: i32, %arg1: i32) -> (i32, i32) {
    %c0_i32 = arith.constant 0 : i32
    %c0_i32_0 = arith.constant 0 : i32
    %c0_i32_1 = arith.constant 0 : i32
    return %c0_i32, %c0_i32_0 : i32, i32
  }
  func.func @transform_5(%arg0: i32, %arg1: i32) -> (i32, i32) {
    %c0_i32 = arith.constant 0 : i32
    %c0_i32_0 = arith.constant 0 : i32
    %c0_i32_1 = arith.constant 0 : i32
    return %c0_i32, %c0_i32_0 : i32, i32
  }
  func.func @transform_6(%arg0: i32, %arg1: i32) -> (i32, i32) {
    %c0_i32 = arith.constant 0 : i32
    %c0_i32_0 = arith.constant 0 : i32
    %c0_i32_1 = arith.constant 0 : i32
    return %c0_i32, %c0_i32_0 : i32, i32
  }
  func.func @transform_7(%arg0: i32, %arg1: i32) -> (i32, i32) {
    %c0_i32 = arith.constant 0 : i32
    %c0_i32_0 = arith.constant 0 : i32
    return %arg0, %c0_i32 : i32, i32
  }
}

</mosaic_0001>

<llo_original>
// kernel: tpu_custom_call.1
$region0: #{tpu_custom_call.1}
  #allocation0 [shape = 'u32[]', space=smem, size = 0x4, offset = 0x4, fixed_abs, tag = 'smem constant byte address 0x4 - core index']
  #allocation1 [shape = 'u32[144,128]{1,0:T(1,128)}', space=vmem, size = 0x12000, scoped, tag = 'internal scratch']
  #allocation2 [shape = 'f32[32,512]{1,0:T(8,128)}', space=vmem, size = 0x10000, scoped, tag = 'scratch operand']
  #allocation3 [shape = 'f32[8,128]{1,0:T(8,128)}', space=vmem, size = 0x1000, scoped, tag = 'scratch operand']
  #allocation4 [shape = 'f32[8,128]{1,0:T(8,128)}', space=vmem, size = 0x1000, scoped, tag = 'scratch operand']
  %s0 = inlined_call_operand.vmem [shape: bf16[1,64,32], index: 0, kind: input, shape index: {}]
  %s1 = inlined_call_operand.vmem [shape: s32[8,1], index: 1, kind: input, shape index: {}]
  %s2 = inlined_call_operand.hbm [shape: bf16[32,512], index: 2, kind: input, shape index: {}]
  %s3 = inlined_call_operand.hbm [shape: bf16[128,512], index: 3, kind: input, shape index: {}]
  %s4 = inlined_call_operand.hbm [shape: f32[1,512], index: 4, kind: input, shape index: {}]
  %s5 = inlined_call_operand.vmem [shape: bf16[128,128], index: 5, kind: input, shape index: {}]
  %s6 = inlined_call_operand.vmem [shape: f32[1,128], index: 6, kind: input, shape index: {}]
  %s7 = inlined_call_operand.hbm [shape: f32[8,128], index: 7, kind: output, shape index: {}]
  %s8 = sld [smem:[#allocation0]]
  $region81: #{tpu_custom_call.1} parent=0
    _
  %s10 = ssub.s32 1, %s8
  %s11 = scalar_select 0, %s10, %s8
  $region1: #{tpu_custom_call.1} parent=0
    #allocation5 [shape = 'u8[32768]{0}', space=vmem, size = 0x8000, scoped, tag = 'input window, operand 2, single buffered']
    #allocation6 [shape = 's32[2]{0}', space=sflag, size = 0x8, scoped, tag = 'scoped memory for tpu_custom_call.1']
    #allocation7 [shape = 's32[2]{0}', space=sflag, size = 0x8, scoped, tag = 'scoped memory for tpu_custom_call.1']
    #allocation8 [shape = 'u8[131072]{0}', space=vmem, size = 0x20000, scoped, tag = 'input window, operand 3, single buffered']
    #allocation9 [shape = 's32[1]{0}', space=sflag, size = 0x4, scoped, tag = 'scoped memory for tpu_custom_call.1']
    #allocation10 [shape = 'u8[2048]{0}', space=vmem, size = 0x800, scoped, tag = 'input window, operand 4, single buffered']
    #allocation11 [shape = 'u8[4096]{0}', space=vmem, size = 0x1000, scoped, tag = 'output window, operand 0, single buffered']
    %12 = vsyncpa [#allocation6], 0
    %13 = vsyncpa [#allocation9], 0
    %14 = vsyncpa [#allocation7], 0
    loop: start=0, step=1, limit=4
    $region2: #{tpu_custom_call.1} parent=1 // loop_pre_header
      _
    $region3: #{tpu_custom_call.1} parent=1 // loop_header
      %s16 = sphi 0, %s20
      %p17 = scmp.ge.s32.totalorder %s16, 4
      %s23 = sphi 0, %s35
      %s24 = sphi 0, %s31
      %s25 = sphi 0, %s23
      %s26 = sphi 0, %s24
      %s27 = sphi 0, %s25
      %s28 = sphi 0, %s26
      %s40 = sphi 0, %s42
      %s43 = sphi 0, %s40
      %s44 = sphi 0, %s43
      %s60 = sphi 0, %s44
      %s66 = sphi 0, %s68
      %s69 = sphi 0, %s66
      %s70 = sphi 0, %s69
      %s86 = sphi 0, %s70
      %s90 = sphi 0, %s90
      %s92 = sphi 0, %s90
      %s93 = sphi 0, %s92
      %s107 = sphi 0, %s93
      %s111 = sphi 0, %s111
      %s113 = sphi 0, %s111
      %s114 = sphi 0, %s113
      %s128 = sphi 0, %s114
      %s132 = sphi 0, %s132
      %s134 = sphi 0, %s132
      %s135 = sphi 0, %s134
      %s149 = sphi 0, %s135
      %s153 = sphi 0, %s153
      %s155 = sphi 0, %s153
      %s156 = sphi 0, %s155
      %s170 = sphi 0, %s156
      %s174 = sphi 0, %s174
      %s176 = sphi 0, %s174
      %s177 = sphi 0, %s176
      %s191 = sphi 0, %s177
      %s197 = sphi 0, %s199
      %s200 = sphi 0, %s197
      %s201 = sphi 0, %s200
      %s217 = sphi 0, %s201
    $region4: #{tpu_custom_call.1} parent=1 // loop_header_branch
      %19 = sbr.rel (%p17) target = $region8
    $region5: #{tpu_custom_call.1} parent=1 // loop_body
      %s21 = ssub.s32 %s16, 1
      %s22 = ssub.s32 %s16, 2
      %s29 = sadd.s32 1, %s24
      %p30 = scmp.ge.s32.totalorder %s29, 2
      %s31 = scalar_select %p30, 0, %s29
      %s32 = sadd.s32 1, %s23
      %s33 = scalar_select %p30, %s32, %s23
      %p34 = scmp.ge.s32.totalorder %s33, 1
      %s35 = scalar_select %p34, 0, %s33
      %s36 = ssub.s32 %s23, %s35
      %s37 = ssub.s32 %s24, %s31
      %s38 = sor.u32 %s36, %s37
      %p39 = scmp.eq.s32.totalorder %s38, 0
      %s41 = sadd.s32 %s40, 1
      %s42 = scalar_select %p39, %s40, %s41
      %p45 = pneg %p39
      %p46 = scmp.eq.s32.totalorder %s16, 1
      %p47 = por %p45, %p46
      %p48 = scmp.ne.s32.totalorder %s40, %s43
      %p49 = scmp.eq.s32.totalorder %s16, 0
      %p50 = por %p48, %p49
      %p51 = scmp.ne.s32.totalorder %s40, %s43
      %p52 = scmp.eq.s32.totalorder %s21, 1
      %p53 = por %p51, %p52
      %p54 = scmp.ne.s32.totalorder %s43, %s44
      %p55 = scmp.eq.s32.totalorder %s21, 0
      %p56 = por %p54, %p55
      %p57 = scmp.ne.s32.totalorder %s43, %s44
      %p58 = scmp.eq.s32.totalorder %s22, 1
      %p59 = por %p57, %p58
      %p61 = scmp.ne.s32.totalorder %s44, %s60
      %p62 = scmp.eq.s32.totalorder %s22, 0
      %p63 = por %p61, %p62
      %s64 = ssub.s32 %s23, %s35
      %p65 = scmp.eq.s32.totalorder %s64, 0
      %s67 = sadd.s32 %s66, 1
      %s68 = scalar_select %p65, %s66, %s67
      %p71 = pneg %p65
      %p72 = scmp.eq.s32.totalorder %s16, 1
      %p73 = por %p71, %p72
      %p74 = scmp.ne.s32.totalorder %s66, %s69
      %p75 = scmp.eq.s32.totalorder %s16, 0
      %p76 = por %p74, %p75
      %p77 = scmp.ne.s32.totalorder %s66, %s69
      %p78 = scmp.eq.s32.totalorder %s21, 1
      %p79 = por %p77, %p78
      %p80 = scmp.ne.s32.totalorder %s69, %s70
      %p81 = scmp.eq.s32.totalorder %s21, 0
      %p82 = por %p80, %p81
      %p83 = scmp.ne.s32.totalorder %s69, %s70
      %p84 = scmp.eq.s32.totalorder %s22, 1
      %p85 = por %p83, %p84
      %p87 = scmp.ne.s32.totalorder %s70, %s86
      %p88 = scmp.eq.s32.totalorder %s22, 0
      %p89 = por %p87, %p88
      %s91 = sadd.s32 %s90, 1
      %p94 = scmp.eq.s32.totalorder %s16, 1
      %p95 = scmp.ne.s32.totalorder %s90, %s92
      %p96 = scmp.eq.s32.totalorder %s16, 0
      %p97 = por %p95, %p96
      %p98 = scmp.ne.s32.totalorder %s90, %s92
      %p99 = scmp.eq.s32.totalorder %s21, 1
      %p100 = por %p98, %p99
      %p101 = scmp.ne.s32.totalorder %s92, %s93
      %p102 = scmp.eq.s32.totalorder %s21, 0
      %p103 = por %p101, %p102
      %p104 = scmp.ne.s32.totalorder %s92, %s93
      %p105 = scmp.eq.s32.totalorder %s22, 1
      %p106 = por %p104, %p105
      %p108 = scmp.ne.s32.totalorder %s93, %s107
      %p109 = scmp.eq.s32.totalorder %s22, 0
      %p110 = por %p108, %p109
      %s112 = sadd.s32 %s111, 1
      %p115 = scmp.eq.s32.totalorder %s16, 1
      %p116 = scmp.ne.s32.totalorder %s111, %s113
      %p117 = scmp.eq.s32.totalorder %s16, 0
      %p118 = por %p116, %p117
      %p119 = scmp.ne.s32.totalorder %s111, %s113
      %p120 = scmp.eq.s32.totalorder %s21, 1
      %p121 = por %p119, %p120
      %p122 = scmp.ne.s32.totalorder %s113, %s114
      %p123 = scmp.eq.s32.totalorder %s21, 0
      %p124 = por %p122, %p123
      %p125 = scmp.ne.s32.totalorder %s113, %s114
      %p126 = scmp.eq.s32.totalorder %s22, 1
      %p127 = por %p125, %p126
      %p129 = scmp.ne.s32.totalorder %s114, %s128
      %p130 = scmp.eq.s32.totalorder %s22, 0
      %p131 = por %p129, %p130
      %s133 = sadd.s32 %s132, 1
      %p136 = scmp.eq.s32.totalorder %s16, 1
      %p137 = scmp.ne.s32.totalorder %s132, %s134
      %p138 = scmp.eq.s32.totalorder %s16, 0
      %p139 = por %p137, %p138
      %p140 = scmp.ne.s32.totalorder %s132, %s134
      %p141 = scmp.eq.s32.totalorder %s21, 1
      %p142 = por %p140, %p141
      %p143 = scmp.ne.s32.totalorder %s134, %s135
      %p144 = scmp.eq.s32.totalorder %s21, 0
      %p145 = por %p143, %p144
      %p146 = scmp.ne.s32.totalorder %s134, %s135
      %p147 = scmp.eq.s32.totalorder %s22, 1
      %p148 = por %p146, %p147
      %p150 = scmp.ne.s32.totalorder %s135, %s149
      %p151 = scmp.eq.s32.totalorder %s22, 0
      %p152 = por %p150, %p151
      %s154 = sadd.s32 %s153, 1
      %p157 = scmp.eq.s32.totalorder %s16, 1
      %p158 = scmp.ne.s32.totalorder %s153, %s155
      %p159 = scmp.eq.s32.totalorder %s16, 0
      %p160 = por %p158, %p159
      %p161 = scmp.ne.s32.totalorder %s153, %s155
      %p162 = scmp.eq.s32.totalorder %s21, 1
      %p163 = por %p161, %p162
      %p164 = scmp.ne.s32.totalorder %s155, %s156
      %p165 = scmp.eq.s32.totalorder %s21, 0
      %p166 = por %p164, %p165
      %p167 = scmp.ne.s32.totalorder %s155, %s156
      %p168 = scmp.eq.s32.totalorder %s22, 1
      %p169 = por %p167, %p168
      %p171 = scmp.ne.s32.totalorder %s156, %s170
      %p172 = scmp.eq.s32.totalorder %s22, 0
      %p173 = por %p171, %p172
      %s175 = sadd.s32 %s174, 1
      %p178 = scmp.eq.s32.totalorder %s16, 1
      %p179 = scmp.ne.s32.totalorder %s174, %s176
      %p180 = scmp.eq.s32.totalorder %s16, 0
      %p181 = por %p179, %p180
      %p182 = scmp.ne.s32.totalorder %s174, %s176
      %p183 = scmp.eq.s32.totalorder %s21, 1
      %p184 = por %p182, %p183
      %p185 = scmp.ne.s32.totalorder %s176, %s177
      %p186 = scmp.eq.s32.totalorder %s21, 0
      %p187 = por %p185, %p186
      %p188 = scmp.ne.s32.totalorder %s176, %s177
      %p189 = scmp.eq.s32.totalorder %s22, 1
      %p190 = por %p188, %p189
      %p192 = scmp.ne.s32.totalorder %s177, %s191
      %p193 = scmp.eq.s32.totalorder %s22, 0
      %p194 = por %p192, %p193
      %s195 = ssub.s32 %s23, %s35
      %p196 = scmp.eq.s32.totalorder %s195, 0
      %s198 = sadd.s32 %s197, 1
      %s199 = scalar_select %p196, %s197, %s198
      %p202 = pneg %p196
      %p203 = scmp.eq.s32.totalorder %s16, 1
      %p204 = por %p202, %p203
      %p205 = scmp.ne.s32.totalorder %s197, %s200
      %p206 = scmp.eq.s32.totalorder %s16, 0
      %p207 = por %p205, %p206
      %p208 = scmp.ne.s32.totalorder %s197, %s200
      %p209 = scmp.eq.s32.totalorder %s21, 1
      %p210 = por %p208, %p209
      %p211 = scmp.ne.s32.totalorder %s200, %s201
      %p212 = scmp.eq.s32.totalorder %s21, 0
      %p213 = por %p211, %p212
      %p214 = scmp.ne.s32.totalorder %s200, %s201
      %p215 = scmp.eq.s32.totalorder %s22, 1
      %p216 = por %p214, %p215
      %p218 = scmp.ne.s32.totalorder %s201, %s217
      %p219 = scmp.eq.s32.totalorder %s22, 0
      %p220 = por %p218, %p219
      %p221 = scmp.le.s32.totalorder 1, %s16
      %p222 = scmp.lt.s32.totalorder %s16, 3
      %p223 = pnand %p221, %p222
      %p224 = pneg %p223
      // Predicated region
      $region9: #{tpu_custom_call.1} parent=5 // pred_check
        _
      $region10: #{tpu_custom_call.1} parent=5 // pred_check_branch
        %226 = sbr.rel (%p223) target = $region12
      $region11: #{tpu_custom_call.1} parent=5 // pred_region
        %s227 = ssub.s32 %s16, 1
        // Predicated region
        $region13: #{tpu_custom_call.1} parent=11 // pred_check
          %p228 = pneg %p82
        $region14: #{tpu_custom_call.1} parent=11 // pred_check_branch
          %230 = sbr.rel (%p228) target = $region16
        $region15: #{tpu_custom_call.1} parent=11 // pred_region
          %p231 = scmp.lt.s32.totalorder %s25, 0
          %s232 = scalar_select %p231, %s25, 0
          %s233 = smul.addr %s232, 8
          %s234 = scalar_lea.vmem %s1, %s233
        $region16: #{tpu_custom_call.1} parent=11 // pred_fallthru
          _
        // Predicated region
        $region17: #{tpu_custom_call.1} parent=11 // pred_check
          %p235 = pneg %p103
        $region18: #{tpu_custom_call.1} parent=11 // pred_check_branch
          %237 = sbr.rel (%p235) target = $region20
        $region19: #{tpu_custom_call.1} parent=11 // pred_region
          %s239 = ssub.s32 1024, 1024
          %240 = vsyncadd [#allocation6], %s239
          %s241 = sshll.u32 [#allocation5], 4
          %s242 = int_to_ptr.vmem [resolvable:$true] %s241
          %247 = dma.hbm_to_vmem [thread:$0]  %s2, 1024, %s242, [#allocation6], 256, 256, 16
        $region20: #{tpu_custom_call.1} parent=11 // pred_fallthru
          _
        // Predicated region
        $region21: #{tpu_custom_call.1} parent=11 // pred_check
          %p248 = pneg %p124
        $region22: #{tpu_custom_call.1} parent=11 // pred_check_branch
          %250 = sbr.rel (%p248) target = $region24
        $region23: #{tpu_custom_call.1} parent=11 // pred_region
          %s252 = ssub.s32 4096, 4096
          %253 = vsyncadd [#allocation9], %s252
          %s254 = sshll.u32 [#allocation8], 4
          %s255 = int_to_ptr.vmem [resolvable:$true] %s254
          %260 = dma.hbm_to_vmem [thread:$0]  %s3, 4096, %s255, [#allocation9], 256, 256, 16
        $region24: #{tpu_custom_call.1} parent=11 // pred_fallthru
          _
        // Predicated region
        $region25: #{tpu_custom_call.1} parent=11 // pred_check
          %p261 = pneg %p145
        $region26: #{tpu_custom_call.1} parent=11 // pred_check_branch
          %263 = sbr.rel (%p261) target = $region28
        $region27: #{tpu_custom_call.1} parent=11 // pred_region
          %s265 = ssub.s32 64, 64
          %266 = vsyncadd [#allocation9], %s265
          %s268 = sshll.u32 [#allocation10], 4
          %s269 = int_to_ptr.vmem [resolvable:$true] %s268
          %271 = dma.hbm_to_vmem [thread:$0]  %s4, 64, %s269, [#allocation9]
        $region28: #{tpu_custom_call.1} parent=11 // pred_fallthru
          _
        // Predicated region
        $region29: #{tpu_custom_call.1} parent=11 // pred_check
          %p272 = pneg %p166
        $region30: #{tpu_custom_call.1} parent=11 // pred_check_branch
          %274 = sbr.rel (%p272) target = $region32
        $region31: #{tpu_custom_call.1} parent=11 // pred_region
          _
        $region32: #{tpu_custom_call.1} parent=11 // pred_fallthru
          _
        // Predicated region
        $region33: #{tpu_custom_call.1} parent=11 // pred_check
          %p275 = pneg %p187
        $region34: #{tpu_custom_call.1} parent=11 // pred_check_branch
          %277 = sbr.rel (%p275) target = $region36
        $region35: #{tpu_custom_call.1} parent=11 // pred_region
          _
        $region36: #{tpu_custom_call.1} parent=11 // pred_fallthru
          _
      $region12: #{tpu_custom_call.1} parent=5 // pred_fallthru
        _
      %p278 = scmp.lt.s32.totalorder %s16, 2
      // Predicated region
      $region37: #{tpu_custom_call.1} parent=5 // pred_check
        %p279 = pneg %p278
      $region38: #{tpu_custom_call.1} parent=5 // pred_check_branch
        %281 = sbr.rel (%p279) target = $region40
      $region39: #{tpu_custom_call.1} parent=5 // pred_region
        // Predicated region
        $region41: #{tpu_custom_call.1} parent=39 // pred_check
          %p282 = pneg %p50
        $region42: #{tpu_custom_call.1} parent=39 // pred_check_branch
          %284 = sbr.rel (%p282) target = $region44
        $region43: #{tpu_custom_call.1} parent=39 // pred_region
          %s285 = smul.u32 4, %s24
          %p286 = scmp.lt.s32.totalorder %s23, 0
          %s287 = scalar_select %p286, %s23, 0
          %p288 = scmp.lt.s32.totalorder %s285, 7
          %s289 = scalar_select %p288, %s285, 7
          %s290 = smul.addr %s287, 8
          %s291 = sadd.s32 %s289, %s290
          %s292 = smul.addr %s291, 4
          %s293 = scalar_lea.vmem %s0, %s292
          %s294 = smul.u32 4, %s24
        $region44: #{tpu_custom_call.1} parent=39 // pred_fallthru
          _
      $region40: #{tpu_custom_call.1} parent=5 // pred_fallthru
        _
      %p295 = scmp.le.s32.totalorder 1, %s16
      %p296 = scmp.lt.s32.totalorder %s16, 3
      %p297 = pnand %p295, %p296
      %p298 = pneg %p297
      // Predicated region
      $region45: #{tpu_custom_call.1} parent=5 // pred_check
        _
      $region46: #{tpu_custom_call.1} parent=5 // pred_check_branch
        %300 = sbr.rel (%p297) target = $region48
      $region47: #{tpu_custom_call.1} parent=5 // pred_region
        %s301 = ssub.s32 %s16, 1
        // Predicated region
        $region49: #{tpu_custom_call.1} parent=47 // pred_check
          %p302 = pneg %p103
        $region50: #{tpu_custom_call.1} parent=47 // pred_check_branch
          %304 = sbr.rel (%p302) target = $region52
        $region51: #{tpu_custom_call.1} parent=47 // pred_region
          %305 = dma.done [#allocation6], 1024
        $region52: #{tpu_custom_call.1} parent=47 // pred_fallthru
          _
        // Predicated region
        $region53: #{tpu_custom_call.1} parent=47 // pred_check
          %p306 = pneg %p124
        $region54: #{tpu_custom_call.1} parent=47 // pred_check_branch
          %308 = sbr.rel (%p306) target = $region56
        $region55: #{tpu_custom_call.1} parent=47 // pred_region
          %309 = dma.done [#allocation9], 4096
        $region56: #{tpu_custom_call.1} parent=47 // pred_fallthru
          _
        // Predicated region
        $region57: #{tpu_custom_call.1} parent=47 // pred_check
          %p310 = pneg %p145
        $region58: #{tpu_custom_call.1} parent=47 // pred_check_branch
          %312 = sbr.rel (%p310) target = $region60
        $region59: #{tpu_custom_call.1} parent=47 // pred_region
          %313 = dma.done [#allocation9], 64
        $region60: #{tpu_custom_call.1} parent=47 // pred_fallthru
          _
        %s314 = smul.u32 4, %s26
        %p315 = scmp.lt.s32.totalorder %s25, 0
        %s316 = scalar_select %p315, %s25, 0
        %p317 = scmp.lt.s32.totalorder %s314, 7
        %s318 = scalar_select %p317, %s314, 7
        %s319 = smul.addr %s316, 8
        %s320 = sadd.s32 %s318, %s319
        %s321 = smul.addr %s320, 4
        %s322 = scalar_lea.vmem %s0, %s321
        %p323 = pneg %p56
        %p324 = pneg %p53
        %p325 = scmp.lt.s32.totalorder %s25, 0
        %s326 = scalar_select %p325, %s25, 0
        %s327 = smul.addr %s326, 8
        %s328 = scalar_lea.vmem %s1, %s327
        %p329 = pneg %p82
        %p330 = pneg %p79
        %p331 = pneg %p103
        %p332 = pneg %p100
        %p333 = pneg %p124
        %p334 = pneg %p121
        %p335 = pneg %p145
        %p336 = pneg %p142
        %p337 = pneg %p166
        %p338 = pneg %p163
        %p339 = pneg %p187
        %p340 = pneg %p184
        %p341 = pneg %p213
        %p342 = pneg %p210
        %s343 = smul.u32 4, %s26
        %p344 = scmp.lt.s32.totalorder %s25, 0
        %s345 = scalar_select %p344, %s25, 0
        %p346 = scmp.lt.s32.totalorder %s343, 7
        %s347 = scalar_select %p346, %s343, 7
        %s348 = smul.addr %s345, 8
        %s349 = sadd.s32 %s347, %s348
        %s350 = smul.addr %s349, 4
        %s351 = scalar_lea.vmem %s0, %s350
        %s352 = smul.u32 4, %s26
        %p353 = scmp.lt.s32.totalorder %s25, 0
        %s354 = scalar_select %p353, %s25, 0
        %s355 = smul.addr %s354, 8
        %s356 = scalar_lea.vmem %s1, %s355
        %p358 = scmp.eq.s32.totalorder %s26, 0
        // Predicated region
        $region61: #{tpu_custom_call.1} parent=47 // pred_check
          %p359 = pneg %p358
        $region62: #{tpu_custom_call.1} parent=47 // pred_check_branch
          %361 = sbr.rel (%p359) target = $region64
        $region63: #{tpu_custom_call.1} parent=47 // pred_region
          %362 = vst [vmem:[#allocation3] sm:$0xff] 0.0
          %363 = vst [vmem:[#allocation4] sm:$0xff] 0.0
        $region64: #{tpu_custom_call.1} parent=47 // pred_fallthru
          _
        %v364 = vld [vmem:[%s351] sm:$0xf]
        %v365 = vld [vmem:[%s351 + $0x4] sm:$0xf]
        %v366 = vld [vmem:[%s351 + $0x8] sm:$0xf]
        %v367 = vld [vmem:[%s351 + $0xc] sm:$0xf]
        %v368 = vld [vmem:[#allocation5] sm:$0xff]
        %v369 = vld [vmem:[#allocation5 + $0x8] sm:$0xff]
        %v370 = vld [vmem:[#allocation5 + $0x10] sm:$0xff]
        %v371 = vld [vmem:[#allocation5 + $0x18] sm:$0xff]
        %v372 = vld [vmem:[#allocation5 + $0x20] sm:$0xff]
        %v373 = vld [vmem:[#allocation5 + $0x28] sm:$0xff]
        %v374 = vld [vmem:[#allocation5 + $0x30] sm:$0xff]
        %v375 = vld [vmem:[#allocation5 + $0x38] sm:$0xff]
        %v376 = vld [vmem:[#allocation10] sm:$0xf]
        %v378 = vlaneseq
        %v379 = vshrl.u32 %v378, 7
        %v380 = vsub.s32 0, %v379
        %v381 = vrot.slane %v376, %v380
        %v382 = vlaneseq
        %v383 = vshrl.u32 %v382, 7
        %v384 = vsub.s32 1, %v383
        %v385 = vrot.slane %v376, %v384
        %v386 = vlaneseq
        %v387 = vshrl.u32 %v386, 7
        %v388 = vsub.s32 2, %v387
        %v389 = vrot.slane %v376, %v388
        %v390 = vlaneseq
        %v391 = vshrl.u32 %v390, 7
        %v392 = vsub.s32 3, %v391
        %v393 = vrot.slane %v376, %v392
        %v402 = vunpack.c.l.b16 %v364
        %v403 = vunpack.c.l.b16 %v365
        %v404 = vunpack.c.l.b16 %v366
        %v405 = vunpack.c.l.b16 %v367
        %v406 = vpack.c.b16 %v403, %v402
        %v407 = vpack.c.b16 %v405, %v404
        %v416 = vunpack.c.l.b16 %v368
        %v417 = vunpack.c.h.b16 %v368
        %v418 = vunpack.c.l.b16 %v369
        %v419 = vunpack.c.h.b16 %v369
        %v420 = vunpack.c.l.b16 %v370
        %v421 = vunpack.c.h.b16 %v370
        %v422 = vunpack.c.l.b16 %v371
        %v423 = vunpack.c.h.b16 %v371
        %v424 = vunpack.c.l.b16 %v372
        %v425 = vunpack.c.h.b16 %v372
        %v426 = vunpack.c.l.b16 %v373
        %v427 = vunpack.c.h.b16 %v373
        %v428 = vunpack.c.l.b16 %v374
        %v429 = vunpack.c.h.b16 %v374
        %v430 = vunpack.c.l.b16 %v375
        %v431 = vunpack.c.h.b16 %v375
        %v432 = vpack.c.b16 %v420, %v416
        %v433 = vpack.c.b16 %v421, %v417
        %v434 = vpack.c.b16 %v422, %v418
        %v435 = vpack.c.b16 %v423, %v419
        %v436 = vpack.c.b16 %v428, %v424
        %v437 = vpack.c.b16 %v429, %v425
        %v438 = vpack.c.b16 %v430, %v426
        %v439 = vpack.c.b16 %v431, %v427
        %vm448 = vcmask 261120
        %v450 = vsel %vm448, %v406, 0
        %v453 = vsel %vm448, %v407, 0
        %455 = vmatprep.subr.bf16.mxu0 0
        %456 = vmatpush1.bf16.msra.mxu0 0
        %457 = vmatprep.subr.bf16.mxu0 0
        %458 = vmatpush1.bf16.msra.mxu0 0
        %459 = vmatprep.subr.bf16.mxu0 0
        %460 = vmatpush1.bf16.msra.mxu0 0
        %461 = vmatprep.subr.bf16.mxu0 0
        %462 = vmatpush1.bf16.msra.mxu0 0
        %463 = vmatprep.subr.bf16.mxu0 0
        %464 = vmatpush1.bf16.msra.mxu0 0
        %465 = vmatprep.subr.bf16.mxu0 0
        %466 = vmatpush1.bf16.msra.mxu0 0
        %467 = vmatprep.subr.bf16.mxu0 %v437
        %468 = vmatpush1.bf16.msra.mxu0 %v436
        %469 = vmatprep.subr.bf16.mxu0 %v433
        %470 = vmatpush1.bf16.msra.mxu0 %v432
        %471 = vmatprep.subr.bf16.mxu0 0
        %472 = vmatpush2.bf16.msra.mxu0 0
        %473 = vmatprep.subr.bf16.mxu0 0
        %474 = vmatpush2.bf16.msra.mxu0 0
        %475 = vmatprep.subr.bf16.mxu0 0
        %476 = vmatpush2.bf16.msra.mxu0 0
        %477 = vmatprep.subr.bf16.mxu0 0
        %478 = vmatpush2.bf16.msra.mxu0 0
        %479 = vmatprep.subr.bf16.mxu0 0
        %480 = vmatpush2.bf16.msra.mxu0 0
        %481 = vmatprep.subr.bf16.mxu0 0
        %482 = vmatpush2.bf16.msra.mxu0 0
        %483 = vmatprep.subr.bf16.mxu0 0
        %484 = vmatpush2.bf16.msra.mxu0 0
        %485 = vmatprep.subr.bf16.mxu0 0
        %486 = vmatpush2.bf16.msra.mxu0 0
        %487 = vmatprep.mubr.bf16.mxu0 0
        %488 = vmatmul.mubr.bf16.gmra.mxu0 %v450
        %v489 = vpop.f32.mrf.mxu0
        %v490 = vadd.f32 %v381, %v489
        %v491 = vpop.f32.mrf.mxu0
        %v492 = vadd.f32 %v385, %v491
        %v493 = vpop.f32.mrf.mxu0
        %v494 = vadd.f32 %v381, %v493
        %v495 = vpop.f32.mrf.mxu0
        %v496 = vadd.f32 %v385, %v495
        %497 = vmatprep.mubr.bf16.mxu0 0
        %498 = vmatmul.mubr.bf16.gmra.mxu0 %v453
        %v499 = vpop.f32.mrf.mxu0
        %v500 = vadd.f32 %v381, %v499
        %v501 = vpop.f32.mrf.mxu0
        %v502 = vadd.f32 %v385, %v501
        %v503 = vpop.f32.mrf.mxu0
        %v504 = vadd.f32 %v381, %v503
        %v505 = vpop.f32.mrf.mxu0
        %v506 = vadd.f32 %v385, %v505
        %507 = vdwg.mxu0
        %508 = vmatprep.subr.bf16.mxu0 0
        %509 = vmatpush1.bf16.msra.mxu0 0
        %510 = vmatprep.subr.bf16.mxu0 0
        %511 = vmatpush1.bf16.msra.mxu0 0
        %512 = vmatprep.subr.bf16.mxu0 0
        %513 = vmatpush1.bf16.msra.mxu0 0
        %514 = vmatprep.subr.bf16.mxu0 0
        %515 = vmatpush1.bf16.msra.mxu0 0
        %516 = vmatprep.subr.bf16.mxu0 0
        %517 = vmatpush1.bf16.msra.mxu0 0
        %518 = vmatprep.subr.bf16.mxu0 0
        %519 = vmatpush1.bf16.msra.mxu0 0
        %520 = vmatprep.subr.bf16.mxu0 %v439
        %521 = vmatpush1.bf16.msra.mxu0 %v438
        %522 = vmatprep.subr.bf16.mxu0 %v435
        %523 = vmatpush1.bf16.msra.mxu0 %v434
        %524 = vmatprep.subr.bf16.mxu0 0
        %525 = vmatpush2.bf16.msra.mxu0 0
        %526 = vmatprep.subr.bf16.mxu0 0
        %527 = vmatpush2.bf16.msra.mxu0 0
        %528 = vmatprep.subr.bf16.mxu0 0
        %529 = vmatpush2.bf16.msra.mxu0 0
        %530 = vmatprep.subr.bf16.mxu0 0
        %531 = vmatpush2.bf16.msra.mxu0 0
        %532 = vmatprep.subr.bf16.mxu0 0
        %533 = vmatpush2.bf16.msra.mxu0 0
        %534 = vmatprep.subr.bf16.mxu0 0
        %535 = vmatpush2.bf16.msra.mxu0 0
        %536 = vmatprep.subr.bf16.mxu0 0
        %537 = vmatpush2.bf16.msra.mxu0 0
        %538 = vmatprep.subr.bf16.mxu0 0
        %539 = vmatpush2.bf16.msra.mxu0 0
        %540 = vmatprep.mubr.bf16.mxu0 0
        %541 = vmatmul.mubr.bf16.gmra.mxu0 %v450
        %v542 = vpop.f32.mrf.mxu0
        %v543 = vadd.f32 %v389, %v542
        %v544 = vpop.f32.mrf.mxu0
        %v545 = vadd.f32 %v393, %v544
        %v546 = vpop.f32.mrf.mxu0
        %v547 = vadd.f32 %v389, %v546
        %v548 = vpop.f32.mrf.mxu0
        %v549 = vadd.f32 %v393, %v548
        %550 = vmatprep.mubr.bf16.mxu0 0
        %551 = vmatmul.mubr.bf16.gmra.mxu0 %v453
        %v552 = vpop.f32.mrf.mxu0
        %v553 = vadd.f32 %v389, %v552
        %v554 = vpop.f32.mrf.mxu0
        %v555 = vadd.f32 %v393, %v554
        %v556 = vpop.f32.mrf.mxu0
        %v557 = vadd.f32 %v389, %v556
        %v558 = vpop.f32.mrf.mxu0
        %v559 = vadd.f32 %v393, %v558
        %560 = vdwg.mxu0
        %561 = vst [vmem:[#allocation2] sm:$0xff] %v490
        %562 = vst [vmem:[#allocation2 + $0x8] sm:$0xff] %v492
        %563 = vst [vmem:[#allocation2 + $0x10] sm:$0xff] %v543
        %564 = vst [vmem:[#allocation2 + $0x18] sm:$0xff] %v545
        %565 = vst [vmem:[#allocation2 + $0x20] sm:$0xff] %v494
        %566 = vst [vmem:[#allocation2 + $0x28] sm:$0xff] %v496
        %567 = vst [vmem:[#allocation2 + $0x30] sm:$0xff] %v547
        %568 = vst [vmem:[#allocation2 + $0x38] sm:$0xff] %v549
        %569 = vst [vmem:[#allocation2 + $0x40] sm:$0xff] %v500
        %570 = vst [vmem:[#allocation2 + $0x48] sm:$0xff] %v502
        %571 = vst [vmem:[#allocation2 + $0x50] sm:$0xff] %v553
        %572 = vst [vmem:[#allocation2 + $0x58] sm:$0xff] %v555
        %573 = vst [vmem:[#allocation2 + $0x60] sm:$0xff] %v504
        %574 = vst [vmem:[#allocation2 + $0x68] sm:$0xff] %v506
        %575 = vst [vmem:[#allocation2 + $0x70] sm:$0xff] %v557
        %576 = vst [vmem:[#allocation2 + $0x78] sm:$0xff] %v559
        %v577 = vld [vmem:[%s356] sm:$0xff]
        %s578 = smul.u32 %s26, 4
        %v579 = vld [vmem:[#allocation3] sm:$0xff]
        %v580 = vld [vmem:[#allocation4] sm:$0xff]
        %s581 = smul.u32 0, 4
        %s582 = smul.addr %s581, 8
        %s583 = scalar_lea.vmem [#allocation2], %s582
        %v584 = vld [vmem:[%s583] sm:$0xff]
        %v585 = vld [vmem:[%s583 + $0x8] sm:$0xff]
        %v586 = vld [vmem:[%s583 + $0x10] sm:$0xff]
        %v587 = vld [vmem:[%s583 + $0x18] sm:$0xff]
        %v588 = vpack.c.bf16 %v579, %v579
        %v589 = vld [vmem:[#allocation8] sm:$0xff]
        %v590 = vld [vmem:[#allocation8 + $0x8] sm:$0xff]
        %v591 = vld [vmem:[#allocation8 + $0x10] sm:$0xff]
        %v592 = vld [vmem:[#allocation8 + $0x18] sm:$0xff]
        %v593 = vld [vmem:[#allocation8 + $0x20] sm:$0xff]
        %v594 = vld [vmem:[#allocation8 + $0x28] sm:$0xff]
        %v595 = vld [vmem:[#allocation8 + $0x30] sm:$0xff]
        %v596 = vld [vmem:[#allocation8 + $0x38] sm:$0xff]
        %v597 = vld [vmem:[#allocation8 + $0x40] sm:$0xff]
        %v598 = vld [vmem:[#allocation8 + $0x48] sm:$0xff]
        %v599 = vld [vmem:[#allocation8 + $0x50] sm:$0xff]
        %v600 = vld [vmem:[#allocation8 + $0x58] sm:$0xff]
        %v601 = vld [vmem:[#allocation8 + $0x60] sm:$0xff]
        %v602 = vld [vmem:[#allocation8 + $0x68] sm:$0xff]
        %v603 = vld [vmem:[#allocation8 + $0x70] sm:$0xff]
        %v604 = vld [vmem:[#allocation8 + $0x78] sm:$0xff]
        %v605 = vld [vmem:[#allocation8 + $0x80] sm:$0xff]
        %v606 = vld [vmem:[#allocation8 + $0x88] sm:$0xff]
        %v607 = vld [vmem:[#allocation8 + $0x90] sm:$0xff]
        %v608 = vld [vmem:[#allocation8 + $0x98] sm:$0xff]
        %v609 = vld [vmem:[#allocation8 + $0xa0] sm:$0xff]
        %v610 = vld [vmem:[#allocation8 + $0xa8] sm:$0xff]
        %v611 = vld [vmem:[#allocation8 + $0xb0] sm:$0xff]
        %v612 = vld [vmem:[#allocation8 + $0xb8] sm:$0xff]
        %v613 = vld [vmem:[#allocation8 + $0xc0] sm:$0xff]
        %v614 = vld [vmem:[#allocation8 + $0xc8] sm:$0xff]
        %v615 = vld [vmem:[#allocation8 + $0xd0] sm:$0xff]
        %v616 = vld [vmem:[#allocation8 + $0xd8] sm:$0xff]
        %v617 = vld [vmem:[#allocation8 + $0xe0] sm:$0xff]
        %v618 = vld [vmem:[#allocation8 + $0xe8] sm:$0xff]
        %v619 = vld [vmem:[#allocation8 + $0xf0] sm:$0xff]
        %v620 = vld [vmem:[#allocation8 + $0xf8] sm:$0xff]
        %v653 = vunpack.c.l.b16 %v589
        %v654 = vunpack.c.h.b16 %v589
        %v655 = vunpack.c.l.b16 %v590
        %v656 = vunpack.c.h.b16 %v590
        %v657 = vunpack.c.l.b16 %v591
        %v658 = vunpack.c.h.b16 %v591
        %v659 = vunpack.c.l.b16 %v592
        %v660 = vunpack.c.h.b16 %v592
        %v661 = vunpack.c.l.b16 %v593
        %v662 = vunpack.c.h.b16 %v593
        %v663 = vunpack.c.l.b16 %v594
        %v664 = vunpack.c.h.b16 %v594
        %v665 = vunpack.c.l.b16 %v595
        %v666 = vunpack.c.h.b16 %v595
        %v667 = vunpack.c.l.b16 %v596
        %v668 = vunpack.c.h.b16 %v596
        %v669 = vunpack.c.l.b16 %v597
        %v670 = vunpack.c.h.b16 %v597
        %v671 = vunpack.c.l.b16 %v598
        %v672 = vunpack.c.h.b16 %v598
        %v673 = vunpack.c.l.b16 %v599
        %v674 = vunpack.c.h.b16 %v599
        %v675 = vunpack.c.l.b16 %v600
        %v676 = vunpack.c.h.b16 %v600
        %v677 = vunpack.c.l.b16 %v601
        %v678 = vunpack.c.h.b16 %v601
        %v679 = vunpack.c.l.b16 %v602
        %v680 = vunpack.c.h.b16 %v602
        %v681 = vunpack.c.l.b16 %v603
        %v682 = vunpack.c.h.b16 %v603
        %v683 = vunpack.c.l.b16 %v604
        %v684 = vunpack.c.h.b16 %v604
        %v685 = vunpack.c.l.b16 %v605
        %v686 = vunpack.c.h.b16 %v605
        %v687 = vunpack.c.l.b16 %v606
        %v688 = vunpack.c.h.b16 %v606
        %v689 = vunpack.c.l.b16 %v607
        %v690 = vunpack.c.h.b16 %v607
        %v691 = vunpack.c.l.b16 %v608
        %v692 = vunpack.c.h.b16 %v608
        %v693 = vunpack.c.l.b16 %v609
        %v694 = vunpack.c.h.b16 %v609
        %v695 = vunpack.c.l.b16 %v610
        %v696 = vunpack.c.h.b16 %v610
        %v697 = vunpack.c.l.b16 %v611
        %v698 = vunpack.c.h.b16 %v611
        %v699 = vunpack.c.l.b16 %v612
        %v700 = vunpack.c.h.b16 %v612
        %v701 = vunpack.c.l.b16 %v613
        %v702 = vunpack.c.h.b16 %v613
        %v703 = vunpack.c.l.b16 %v614
        %v704 = vunpack.c.h.b16 %v614
        %v705 = vunpack.c.l.b16 %v615
        %v706 = vunpack.c.h.b16 %v615
        %v707 = vunpack.c.l.b16 %v616
        %v708 = vunpack.c.h.b16 %v616
        %v709 = vunpack.c.l.b16 %v617
        %v710 = vunpack.c.h.b16 %v617
        %v711 = vunpack.c.l.b16 %v618
        %v712 = vunpack.c.h.b16 %v618
        %v713 = vunpack.c.l.b16 %v619
        %v714 = vunpack.c.h.b16 %v619
        %v715 = vunpack.c.l.b16 %v620
        %v716 = vunpack.c.h.b16 %v620
        %v717 = vpack.c.b16 %v657, %v653
        %v718 = vpack.c.b16 %v658, %v654
        %v719 = vpack.c.b16 %v659, %v655
        %v720 = vpack.c.b16 %v660, %v656
        %v721 = vpack.c.b16 %v665, %v661
        %v722 = vpack.c.b16 %v666, %v662
        %v723 = vpack.c.b16 %v667, %v663
        %v724 = vpack.c.b16 %v668, %v664
        %v725 = vpack.c.b16 %v673, %v669
        %v726 = vpack.c.b16 %v674, %v670
        %v727 = vpack.c.b16 %v675, %v671
        %v728 = vpack.c.b16 %v676, %v672
        %v729 = vpack.c.b16 %v681, %v677
        %v730 = vpack.c.b16 %v682, %v678
        %v731 = vpack.c.b16 %v683, %v679
        %v732 = vpack.c.b16 %v684, %v680
        %v733 = vpack.c.b16 %v689, %v685
        %v734 = vpack.c.b16 %v690, %v686
        %v735 = vpack.c.b16 %v691, %v687
        %v736 = vpack.c.b16 %v692, %v688
        %v737 = vpack.c.b16 %v697, %v693
        %v738 = vpack.c.b16 %v698, %v694
        %v739 = vpack.c.b16 %v699, %v695
        %v740 = vpack.c.b16 %v700, %v696
        %v741 = vpack.c.b16 %v705, %v701
        %v742 = vpack.c.b16 %v706, %v702
        %v743 = vpack.c.b16 %v707, %v703
        %v744 = vpack.c.b16 %v708, %v704
        %v745 = vpack.c.b16 %v713, %v709
        %v746 = vpack.c.b16 %v714, %v710
        %v747 = vpack.c.b16 %v715, %v711
        %v748 = vpack.c.b16 %v716, %v712
        %781 = vmatprep.subr.bf16.mxu0 %v746
        %782 = vmatpush1.bf16.msra.mxu0 %v745
        %783 = vmatprep.subr.bf16.mxu0 %v742
        %784 = vmatpush1.bf16.msra.mxu0 %v741
        %785 = vmatprep.subr.bf16.mxu0 %v738
        %786 = vmatpush1.bf16.msra.mxu0 %v737
        %787 = vmatprep.subr.bf16.mxu0 %v734
        %788 = vmatpush1.bf16.msra.mxu0 %v733
        %789 = vmatprep.subr.bf16.mxu0 %v730
        %790 = vmatpush1.bf16.msra.mxu0 %v729
        %791 = vmatprep.subr.bf16.mxu0 %v726
        %792 = vmatpush1.bf16.msra.mxu0 %v725
        %793 = vmatprep.subr.bf16.mxu0 %v722
        %794 = vmatpush1.bf16.msra.mxu0 %v721
        %795 = vmatprep.subr.bf16.mxu0 %v718
        %796 = vmatpush1.bf16.msra.mxu0 %v717
        %797 = vmatprep.subr.bf16.mxu0 0
        %798 = vmatpush2.bf16.msra.mxu0 0
        %799 = vmatprep.subr.bf16.mxu0 0
        %800 = vmatpush2.bf16.msra.mxu0 0
        %801 = vmatprep.subr.bf16.mxu0 0
        %802 = vmatpush2.bf16.msra.mxu0 0
        %803 = vmatprep.subr.bf16.mxu0 0
        %804 = vmatpush2.bf16.msra.mxu0 0
        %805 = vmatprep.subr.bf16.mxu0 0
        %806 = vmatpush2.bf16.msra.mxu0 0
        %807 = vmatprep.subr.bf16.mxu0 0
        %808 = vmatpush2.bf16.msra.mxu0 0
        %809 = vmatprep.subr.bf16.mxu0 0
        %810 = vmatpush2.bf16.msra.mxu0 0
        %811 = vmatprep.subr.bf16.mxu0 0
        %812 = vmatpush2.bf16.msra.mxu0 0
        %813 = vmatprep.mubr.bf16.mxu0 0
        %814 = vmatmul.mubr.bf16.gmra.mxu0 %v588
        %v815 = vpop.f32.mrf.mxu0
        %v816 = vadd.f32 0.0, %v815
        %v817 = vpop.f32.mrf.mxu0
        %v818 = vadd.f32 0.0, %v817
        %v819 = vpop.f32.mrf.mxu0
        %v820 = vpop.f32.mrf.mxu0
        %821 = vdwg.mxu0
        %822 = vmatprep.subr.bf16.mxu0 %v748
        %823 = vmatpush1.bf16.msra.mxu0 %v747
        %824 = vmatprep.subr.bf16.mxu0 %v744
        %825 = vmatpush1.bf16.msra.mxu0 %v743
        %826 = vmatprep.subr.bf16.mxu0 %v740
        %827 = vmatpush1.bf16.msra.mxu0 %v739
        %828 = vmatprep.subr.bf16.mxu0 %v736
        %829 = vmatpush1.bf16.msra.mxu0 %v735
        %830 = vmatprep.subr.bf16.mxu0 %v732
        %831 = vmatpush1.bf16.msra.mxu0 %v731
        %832 = vmatprep.subr.bf16.mxu0 %v728
        %833 = vmatpush1.bf16.msra.mxu0 %v727
        %834 = vmatprep.subr.bf16.mxu0 %v724
        %835 = vmatpush1.bf16.msra.mxu0 %v723
        %836 = vmatprep.subr.bf16.mxu0 %v720
        %837 = vmatpush1.bf16.msra.mxu0 %v719
        %838 = vmatprep.subr.bf16.mxu0 0
        %839 = vmatpush2.bf16.msra.mxu0 0
        %840 = vmatprep.subr.bf16.mxu0 0
        %841 = vmatpush2.bf16.msra.mxu0 0
        %842 = vmatprep.subr.bf16.mxu0 0
        %843 = vmatpush2.bf16.msra.mxu0 0
        %844 = vmatprep.subr.bf16.mxu0 0
        %845 = vmatpush2.bf16.msra.mxu0 0
        %846 = vmatprep.subr.bf16.mxu0 0
        %847 = vmatpush2.bf16.msra.mxu0 0
        %848 = vmatprep.subr.bf16.mxu0 0
        %849 = vmatpush2.bf16.msra.mxu0 0
        %850 = vmatprep.subr.bf16.mxu0 0
        %851 = vmatpush2.bf16.msra.mxu0 0
        %852 = vmatprep.subr.bf16.mxu0 0
        %853 = vmatpush2.bf16.msra.mxu0 0
        %854 = vmatprep.mubr.bf16.mxu0 0
        %855 = vmatmul.mubr.bf16.gmra.mxu0 %v588
        %v856 = vpop.f32.mrf.mxu0
        %v857 = vadd.f32 0.0, %v856
        %v858 = vpop.f32.mrf.mxu0
        %v859 = vadd.f32 0.0, %v858
        %v860 = vpop.f32.mrf.mxu0
        %v861 = vpop.f32.mrf.mxu0
        %862 = vdwg.mxu0
        %v863 = vadd.f32 %v584, %v816
        %v864 = vadd.f32 %v585, %v818
        %v865 = vadd.f32 %v586, %v857
        %v866 = vadd.f32 %v587, %v859
        %v867 = vxor.u32 %v863, 2147483648
        %v868 = vmul.f32 %v867, 1.442695
        %v869 = vpow.pop %v868
        %v870 = vadd.f32 %v869, 1.0
        %v871 = vrcp.pop %v870
        %v872 = vmul.f32 1.0, %v871
        %v873 = vxor.u32 %v864, 2147483648
        %v874 = vmul.f32 %v873, 1.442695
        %v875 = vpow.pop %v874
        %v876 = vadd.f32 %v875, 1.0
        %v877 = vrcp.pop %v876
        %v878 = vmul.f32 1.0, %v877
        %v879 = vtanh.pop %v865
        %v880 = vxor.u32 %v866, 2147483648
        %v881 = vmul.f32 %v880, 1.442695
        %v882 = vpow.pop %v881
        %v883 = vadd.f32 %v882, 1.0
        %v884 = vrcp.pop %v883
        %v885 = vmul.f32 1.0, %v884
        %v886 = vmul.f32 %v878, %v580
        %v887 = vmul.f32 %v872, %v879
        %v888 = vadd.f32 %v886, %v887
        %v889 = vtanh.pop %v888
        %v890 = vmul.f32 %v885, %v889
        %v891 = vstv %s578
        %vm892 = vcmp.lt.s32.totalorder %v891, %v577
        %v893 = vsel %vm892, 1, 0
        %894 = vset.pattern.permute.xlu0 0
        %895 = vperm.xlu0 %894, %v893
        %v896 = vpop.permute.xlu0 %895
        %vm897 = vcmp.eq.s32.totalorder %v896, 1
        %v898 = vsel %vm897, %v890, %v579
        %899 = vst [vmem:[#allocation3] sm:$0xff] %v898
        %v900 = vsel %vm897, %v888, %v580
        %901 = vst [vmem:[#allocation4] sm:$0xff] %v900
        %v902 = vld [vmem:[#allocation3] sm:$0xff]
        %v903 = vld [vmem:[#allocation4] sm:$0xff]
        %s904 = smul.u32 1, 4
        %s905 = smul.addr %s904, 8
        %s906 = scalar_lea.vmem [#allocation2], %s905
        %v907 = vld [vmem:[%s906] sm:$0xff]
        %v908 = vld [vmem:[%s906 + $0x8] sm:$0xff]
        %v909 = vld [vmem:[%s906 + $0x10] sm:$0xff]
        %v910 = vld [vmem:[%s906 + $0x18] sm:$0xff]
        %v911 = vpack.c.bf16 %v902, %v902
        %v912 = vld [vmem:[#allocation8] sm:$0xff]
        %v913 = vld [vmem:[#allocation8 + $0x8] sm:$0xff]
        %v914 = vld [vmem:[#allocation8 + $0x10] sm:$0xff]
        %v915 = vld [vmem:[#allocation8 + $0x18] sm:$0xff]
        %v916 = vld [vmem:[#allocation8 + $0x20] sm:$0xff]
        %v917 = vld [vmem:[#allocation8 + $0x28] sm:$0xff]
        %v918 = vld [vmem:[#allocation8 + $0x30] sm:$0xff]
        %v919 = vld [vmem:[#allocation8 + $0x38] sm:$0xff]
        %v920 = vld [vmem:[#allocation8 + $0x40] sm:$0xff]
        %v921 = vld [vmem:[#allocation8 + $0x48] sm:$0xff]
        %v922 = vld [vmem:[#allocation8 + $0x50] sm:$0xff]
        %v923 = vld [vmem:[#allocation8 + $0x58] sm:$0xff]
        %v924 = vld [vmem:[#allocation8 + $0x60] sm:$0xff]
        %v925 = vld [vmem:[#allocation8 + $0x68] sm:$0xff]
        %v926 = vld [vmem:[#allocation8 + $0x70] sm:$0xff]
        %v927 = vld [vmem:[#allocation8 + $0x78] sm:$0xff]
        %v928 = vld [vmem:[#allocation8 + $0x80] sm:$0xff]
        %v929 = vld [vmem:[#allocation8 + $0x88] sm:$0xff]
        %v930 = vld [vmem:[#allocation8 + $0x90] sm:$0xff]
        %v931 = vld [vmem:[#allocation8 + $0x98] sm:$0xff]
        %v932 = vld [vmem:[#allocation8 + $0xa0] sm:$0xff]
        %v933 = vld [vmem:[#allocation8 + $0xa8] sm:$0xff]
        %v934 = vld [vmem:[#allocation8 + $0xb0] sm:$0xff]
        %v935 = vld [vmem:[#allocation8 + $0xb8] sm:$0xff]
        %v936 = vld [vmem:[#allocation8 + $0xc0] sm:$0xff]
        %v937 = vld [vmem:[#allocation8 + $0xc8] sm:$0xff]
        %v938 = vld [vmem:[#allocation8 + $0xd0] sm:$0xff]
        %v939 = vld [vmem:[#allocation8 + $0xd8] sm:$0xff]
        %v940 = vld [vmem:[#allocation8 + $0xe0] sm:$0xff]
        %v941 = vld [vmem:[#allocation8 + $0xe8] sm:$0xff]
        %v942 = vld [vmem:[#allocation8 + $0xf0] sm:$0xff]
        %v943 = vld [vmem:[#allocation8 + $0xf8] sm:$0xff]
        %v976 = vunpack.c.l.b16 %v912
        %v977 = vunpack.c.h.b16 %v912
        %v978 = vunpack.c.l.b16 %v913
        %v979 = vunpack.c.h.b16 %v913
        %v980 = vunpack.c.l.b16 %v914
        %v981 = vunpack.c.h.b16 %v914
        %v982 = vunpack.c.l.b16 %v915
        %v983 = vunpack.c.h.b16 %v915
        %v984 = vunpack.c.l.b16 %v916
        %v985 = vunpack.c.h.b16 %v916
        %v986 = vunpack.c.l.b16 %v917
        %v987 = vunpack.c.h.b16 %v917
        %v988 = vunpack.c.l.b16 %v918
        %v989 = vunpack.c.h.b16 %v918
        %v990 = vunpack.c.l.b16 %v919
        %v991 = vunpack.c.h.b16 %v919
        %v992 = vunpack.c.l.b16 %v920
        %v993 = vunpack.c.h.b16 %v920
        %v994 = vunpack.c.l.b16 %v921
        %v995 = vunpack.c.h.b16 %v921
        %v996 = vunpack.c.l.b16 %v922
        %v997 = vunpack.c.h.b16 %v922
        %v998 = vunpack.c.l.b16 %v923
        %v999 = vunpack.c.h.b16 %v923
        %v1000 = vunpack.c.l.b16 %v924
        %v1001 = vunpack.c.h.b16 %v924
        %v1002 = vunpack.c.l.b16 %v925
        %v1003 = vunpack.c.h.b16 %v925
        %v1004 = vunpack.c.l.b16 %v926
        %v1005 = vunpack.c.h.b16 %v926
        %v1006 = vunpack.c.l.b16 %v927
        %v1007 = vunpack.c.h.b16 %v927
        %v1008 = vunpack.c.l.b16 %v928
        %v1009 = vunpack.c.h.b16 %v928
        %v1010 = vunpack.c.l.b16 %v929
        %v1011 = vunpack.c.h.b16 %v929
        %v1012 = vunpack.c.l.b16 %v930
        %v1013 = vunpack.c.h.b16 %v930
        %v1014 = vunpack.c.l.b16 %v931
        %v1015 = vunpack.c.h.b16 %v931
        %v1016 = vunpack.c.l.b16 %v932
        %v1017 = vunpack.c.h.b16 %v932
        %v1018 = vunpack.c.l.b16 %v933
        %v1019 = vunpack.c.h.b16 %v933
        %v1020 = vunpack.c.l.b16 %v934
        %v1021 = vunpack.c.h.b16 %v934
        %v1022 = vunpack.c.l.b16 %v935
        %v1023 = vunpack.c.h.b16 %v935
        %v1024 = vunpack.c.l.b16 %v936
        %v1025 = vunpack.c.h.b16 %v936
        %v1026 = vunpack.c.l.b16 %v937
        %v1027 = vunpack.c.h.b16 %v937
        %v1028 = vunpack.c.l.b16 %v938
        %v1029 = vunpack.c.h.b16 %v938
        %v1030 = vunpack.c.l.b16 %v939
        %v1031 = vunpack.c.h.b16 %v939
        %v1032 = vunpack.c.l.b16 %v940
        %v1033 = vunpack.c.h.b16 %v940
        %v1034 = vunpack.c.l.b16 %v941
        %v1035 = vunpack.c.h.b16 %v941
        %v1036 = vunpack.c.l.b16 %v942
        %v1037 = vunpack.c.h.b16 %v942
        %v1038 = vunpack.c.l.b16 %v943
        %v1039 = vunpack.c.h.b16 %v943
        %v1040 = vpack.c.b16 %v980, %v976
        %v1041 = vpack.c.b16 %v981, %v977
        %v1042 = vpack.c.b16 %v982, %v978
        %v1043 = vpack.c.b16 %v983, %v979
        %v1044 = vpack.c.b16 %v988, %v984
        %v1045 = vpack.c.b16 %v989, %v985
        %v1046 = vpack.c.b16 %v990, %v986
        %v1047 = vpack.c.b16 %v991, %v987
        %v1048 = vpack.c.b16 %v996, %v992
        %v1049 = vpack.c.b16 %v997, %v993
        %v1050 = vpack.c.b16 %v998, %v994
        %v1051 = vpack.c.b16 %v999, %v995
        %v1052 = vpack.c.b16 %v1004, %v1000
        %v1053 = vpack.c.b16 %v1005, %v1001
        %v1054 = vpack.c.b16 %v1006, %v1002
        %v1055 = vpack.c.b16 %v1007, %v1003
        %v1056 = vpack.c.b16 %v1012, %v1008
        %v1057 = vpack.c.b16 %v1013, %v1009
        %v1058 = vpack.c.b16 %v1014, %v1010
        %v1059 = vpack.c.b16 %v1015, %v1011
        %v1060 = vpack.c.b16 %v1020, %v1016
        %v1061 = vpack.c.b16 %v1021, %v1017
        %v1062 = vpack.c.b16 %v1022, %v1018
        %v1063 = vpack.c.b16 %v1023, %v1019
        %v1064 = vpack.c.b16 %v1028, %v1024
        %v1065 = vpack.c.b16 %v1029, %v1025
        %v1066 = vpack.c.b16 %v1030, %v1026
        %v1067 = vpack.c.b16 %v1031, %v1027
        %v1068 = vpack.c.b16 %v1036, %v1032
        %v1069 = vpack.c.b16 %v1037, %v1033
        %v1070 = vpack.c.b16 %v1038, %v1034
        %v1071 = vpack.c.b16 %v1039, %v1035
        %1104 = vmatprep.subr.bf16.mxu0 %v1069
        %1105 = vmatpush1.bf16.msra.mxu0 %v1068
        %1106 = vmatprep.subr.bf16.mxu0 %v1065
        %1107 = vmatpush1.bf16.msra.mxu0 %v1064
        %1108 = vmatprep.subr.bf16.mxu0 %v1061
        %1109 = vmatpush1.bf16.msra.mxu0 %v1060
        %1110 = vmatprep.subr.bf16.mxu0 %v1057
        %1111 = vmatpush1.bf16.msra.mxu0 %v1056
        %1112 = vmatprep.subr.bf16.mxu0 %v1053
        %1113 = vmatpush1.bf16.msra.mxu0 %v1052
        %1114 = vmatprep.subr.bf16.mxu0 %v1049
        %1115 = vmatpush1.bf16.msra.mxu0 %v1048
        %1116 = vmatprep.subr.bf16.mxu0 %v1045
        %1117 = vmatpush1.bf16.msra.mxu0 %v1044
        %1118 = vmatprep.subr.bf16.mxu0 %v1041
        %1119 = vmatpush1.bf16.msra.mxu0 %v1040
        %1120 = vmatprep.subr.bf16.mxu0 0
        %1121 = vmatpush2.bf16.msra.mxu0 0
        %1122 = vmatprep.subr.bf16.mxu0 0
        %1123 = vmatpush2.bf16.msra.mxu0 0
        %1124 = vmatprep.subr.bf16.mxu0 0
        %1125 = vmatpush2.bf16.msra.mxu0 0
        %1126 = vmatprep.subr.bf16.mxu0 0
        %1127 = vmatpush2.bf16.msra.mxu0 0
        %1128 = vmatprep.subr.bf16.mxu0 0
        %1129 = vmatpush2.bf16.msra.mxu0 0
        %1130 = vmatprep.subr.bf16.mxu0 0
        %1131 = vmatpush2.bf16.msra.mxu0 0
        %1132 = vmatprep.subr.bf16.mxu0 0
        %1133 = vmatpush2.bf16.msra.mxu0 0
        %1134 = vmatprep.subr.bf16.mxu0 0
        %1135 = vmatpush2.bf16.msra.mxu0 0
        %1136 = vmatprep.mubr.bf16.mxu0 0
        %1137 = vmatmul.mubr.bf16.gmra.mxu0 %v911
        %v1138 = vpop.f32.mrf.mxu0
        %v1139 = vadd.f32 0.0, %v1138
        %v1140 = vpop.f32.mrf.mxu0
        %v1141 = vadd.f32 0.0, %v1140
        %v1142 = vpop.f32.mrf.mxu0
        %v1143 = vpop.f32.mrf.mxu0
        %1144 = vdwg.mxu0
        %1145 = vmatprep.subr.bf16.mxu0 %v1071
        %1146 = vmatpush1.bf16.msra.mxu0 %v1070
        %1147 = vmatprep.subr.bf16.mxu0 %v1067
        %1148 = vmatpush1.bf16.msra.mxu0 %v1066
        %1149 = vmatprep.subr.bf16.mxu0 %v1063
        %1150 = vmatpush1.bf16.msra.mxu0 %v1062
        %1151 = vmatprep.subr.bf16.mxu0 %v1059
        %1152 = vmatpush1.bf16.msra.mxu0 %v1058
        %1153 = vmatprep.subr.bf16.mxu0 %v1055
        %1154 = vmatpush1.bf16.msra.mxu0 %v1054
        %1155 = vmatprep.subr.bf16.mxu0 %v1051
        %1156 = vmatpush1.bf16.msra.mxu0 %v1050
        %1157 = vmatprep.subr.bf16.mxu0 %v1047
        %1158 = vmatpush1.bf16.msra.mxu0 %v1046
        %1159 = vmatprep.subr.bf16.mxu0 %v1043
        %1160 = vmatpush1.bf16.msra.mxu0 %v1042
        %1161 = vmatprep.subr.bf16.mxu0 0
        %1162 = vmatpush2.bf16.msra.mxu0 0
        %1163 = vmatprep.subr.bf16.mxu0 0
        %1164 = vmatpush2.bf16.msra.mxu0 0
        %1165 = vmatprep.subr.bf16.mxu0 0
        %1166 = vmatpush2.bf16.msra.mxu0 0
        %1167 = vmatprep.subr.bf16.mxu0 0
        %1168 = vmatpush2.bf16.msra.mxu0 0
        %1169 = vmatprep.subr.bf16.mxu0 0
        %1170 = vmatpush2.bf16.msra.mxu0 0
        %1171 = vmatprep.subr.bf16.mxu0 0
        %1172 = vmatpush2.bf16.msra.mxu0 0
        %1173 = vmatprep.subr.bf16.mxu0 0
        %1174 = vmatpush2.bf16.msra.mxu0 0
        %1175 = vmatprep.subr.bf16.mxu0 0
        %1176 = vmatpush2.bf16.msra.mxu0 0
        %1177 = vmatprep.mubr.bf16.mxu0 0
        %1178 = vmatmul.mubr.bf16.gmra.mxu0 %v911
        %v1179 = vpop.f32.mrf.mxu0
        %v1180 = vadd.f32 0.0, %v1179
        %v1181 = vpop.f32.mrf.mxu0
        %v1182 = vadd.f32 0.0, %v1181
        %v1183 = vpop.f32.mrf.mxu0
        %v1184 = vpop.f32.mrf.mxu0
        %1185 = vdwg.mxu0
        %v1186 = vadd.f32 %v907, %v1139
        %v1187 = vadd.f32 %v908, %v1141
        %v1188 = vadd.f32 %v909, %v1180
        %v1189 = vadd.f32 %v910, %v1182
        %v1190 = vxor.u32 %v1186, 2147483648
        %v1191 = vmul.f32 %v1190, 1.442695
        %v1192 = vpow.pop %v1191
        %v1193 = vadd.f32 %v1192, 1.0
        %v1194 = vrcp.pop %v1193
        %v1195 = vmul.f32 1.0, %v1194
        %v1196 = vxor.u32 %v1187, 2147483648
        %v1197 = vmul.f32 %v1196, 1.442695
        %v1198 = vpow.pop %v1197
        %v1199 = vadd.f32 %v1198, 1.0
        %v1200 = vrcp.pop %v1199
        %v1201 = vmul.f32 1.0, %v1200
        %v1202 = vtanh.pop %v1188
        %v1203 = vxor.u32 %v1189, 2147483648
        %v1204 = vmul.f32 %v1203, 1.442695
        %v1205 = vpow.pop %v1204
        %v1206 = vadd.f32 %v1205, 1.0
        %v1207 = vrcp.pop %v1206
        %v1208 = vmul.f32 1.0, %v1207
        %v1209 = vmul.f32 %v1201, %v903
        %v1210 = vmul.f32 %v1195, %v1202
        %v1211 = vadd.f32 %v1209, %v1210
        %v1212 = vtanh.pop %v1211
        %v1213 = vmul.f32 %v1208, %v1212
        %s1214 = sadd.s32 %s578, 1
        %v1215 = vstv %s1214
        %vm1216 = vcmp.lt.s32.totalorder %v1215, %v577
        %v1217 = vsel %vm1216, 1, 0
        %1218 = vset.pattern.permute.xlu0 0
        %1219 = vperm.xlu0 %1218, %v1217
        %v1220 = vpop.permute.xlu0 %1219
        %vm1221 = vcmp.eq.s32.totalorder %v1220, 1
        %v1222 = vsel %vm1221, %v1213, %v902
        %1223 = vst [vmem:[#allocation3] sm:$0xff] %v1222
        %v1224 = vsel %vm1221, %v1211, %v903
        %1225 = vst [vmem:[#allocation4] sm:$0xff] %v1224
        %v1226 = vld [vmem:[#allocation3] sm:$0xff]
        %v1227 = vld [vmem:[#allocation4] sm:$0xff]
        %s1228 = smul.u32 2, 4
        %s1229 = smul.addr %s1228, 8
        %s1230 = scalar_lea.vmem [#allocation2], %s1229
        %v1231 = vld [vmem:[%s1230] sm:$0xff]
        %v1232 = vld [vmem:[%s1230 + $0x8] sm:$0xff]
        %v1233 = vld [vmem:[%s1230 + $0x10] sm:$0xff]
        %v1234 = vld [vmem:[%s1230 + $0x18] sm:$0xff]
        %v1235 = vpack.c.bf16 %v1226, %v1226
        %v1236 = vld [vmem:[#allocation8] sm:$0xff]
        %v1237 = vld [vmem:[#allocation8 + $0x8] sm:$0xff]
        %v1238 = vld [vmem:[#allocation8 + $0x10] sm:$0xff]
        %v1239 = vld [vmem:[#allocation8 + $0x18] sm:$0xff]
        %v1240 = vld [vmem:[#allocation8 + $0x20] sm:$0xff]
        %v1241 = vld [vmem:[#allocation8 + $0x28] sm:$0xff]
        %v1242 = vld [vmem:[#allocation8 + $0x30] sm:$0xff]
        %v1243 = vld [vmem:[#allocation8 + $0x38] sm:$0xff]
        %v1244 = vld [vmem:[#allocation8 + $0x40] sm:$0xff]
        %v1245 = vld [vmem:[#allocation8 + $0x48] sm:$0xff]
        %v1246 = vld [vmem:[#allocation8 + $0x50] sm:$0xff]
        %v1247 = vld [vmem:[#allocation8 + $0x58] sm:$0xff]
        %v1248 = vld [vmem:[#allocation8 + $0x60] sm:$0xff]
        %v1249 = vld [vmem:[#allocation8 + $0x68] sm:$0xff]
        %v1250 = vld [vmem:[#allocation8 + $0x70] sm:$0xff]
        %v1251 = vld [vmem:[#allocation8 + $0x78] sm:$0xff]
        %v1252 = vld [vmem:[#allocation8 + $0x80] sm:$0xff]
        %v1253 = vld [vmem:[#allocation8 + $0x88] sm:$0xff]
        %v1254 = vld [vmem:[#allocation8 + $0x90] sm:$0xff]
        %v1255 = vld [vmem:[#allocation8 + $0x98] sm:$0xff]
        %v1256 = vld [vmem:[#allocation8 + $0xa0] sm:$0xff]
        %v1257 = vld [vmem:[#allocation8 + $0xa8] sm:$0xff]
        %v1258 = vld [vmem:[#allocation8 + $0xb0] sm:$0xff]
        %v1259 = vld [vmem:[#allocation8 + $0xb8] sm:$0xff]
        %v1260 = vld [vmem:[#allocation8 + $0xc0] sm:$0xff]
        %v1261 = vld [vmem:[#allocation8 + $0xc8] sm:$0xff]
        %v1262 = vld [vmem:[#allocation8 + $0xd0] sm:$0xff]
        %v1263 = vld [vmem:[#allocation8 + $0xd8] sm:$0xff]
        %v1264 = vld [vmem:[#allocation8 + $0xe0] sm:$0xff]
        %v1265 = vld [vmem:[#allocation8 + $0xe8] sm:$0xff]
        %v1266 = vld [vmem:[#allocation8 + $0xf0] sm:$0xff]
        %v1267 = vld [vmem:[#allocation8 + $0xf8] sm:$0xff]
        %v1300 = vunpack.c.l.b16 %v1236
        %v1301 = vunpack.c.h.b16 %v1236
        %v1302 = vunpack.c.l.b16 %v1237
        %v1303 = vunpack.c.h.b16 %v1237
        %v1304 = vunpack.c.l.b16 %v1238
        %v1305 = vunpack.c.h.b16 %v1238
        %v1306 = vunpack.c.l.b16 %v1239
        %v1307 = vunpack.c.h.b16 %v1239
        %v1308 = vunpack.c.l.b16 %v1240
        %v1309 = vunpack.c.h.b16 %v1240
        %v1310 = vunpack.c.l.b16 %v1241
        %v1311 = vunpack.c.h.b16 %v1241
        %v1312 = vunpack.c.l.b16 %v1242
        %v1313 = vunpack.c.h.b16 %v1242
        %v1314 = vunpack.c.l.b16 %v1243
        %v1315 = vunpack.c.h.b16 %v1243
        %v1316 = vunpack.c.l.b16 %v1244
        %v1317 = vunpack.c.h.b16 %v1244
        %v1318 = vunpack.c.l.b16 %v1245
        %v1319 = vunpack.c.h.b16 %v1245
        %v1320 = vunpack.c.l.b16 %v1246
        %v1321 = vunpack.c.h.b16 %v1246
        %v1322 = vunpack.c.l.b16 %v1247
        %v1323 = vunpack.c.h.b16 %v1247
        %v1324 = vunpack.c.l.b16 %v1248
        %v1325 = vunpack.c.h.b16 %v1248
        %v1326 = vunpack.c.l.b16 %v1249
        %v1327 = vunpack.c.h.b16 %v1249
        %v1328 = vunpack.c.l.b16 %v1250
        %v1329 = vunpack.c.h.b16 %v1250
        %v1330 = vunpack.c.l.b16 %v1251
        %v1331 = vunpack.c.h.b16 %v1251
        %v1332 = vunpack.c.l.b16 %v1252
        %v1333 = vunpack.c.h.b16 %v1252
        %v1334 = vunpack.c.l.b16 %v1253
        %v1335 = vunpack.c.h.b16 %v1253
        %v1336 = vunpack.c.l.b16 %v1254
        %v1337 = vunpack.c.h.b16 %v1254
        %v1338 = vunpack.c.l.b16 %v1255
        %v1339 = vunpack.c.h.b16 %v1255
        %v1340 = vunpack.c.l.b16 %v1256
        %v1341 = vunpack.c.h.b16 %v1256
        %v1342 = vunpack.c.l.b16 %v1257
        %v1343 = vunpack.c.h.b16 %v1257
        %v1344 = vunpack.c.l.b16 %v1258
        %v1345 = vunpack.c.h.b16 %v1258
        %v1346 = vunpack.c.l.b16 %v1259
        %v1347 = vunpack.c.h.b16 %v1259
        %v1348 = vunpack.c.l.b16 %v1260
        %v1349 = vunpack.c.h.b16 %v1260
        %v1350 = vunpack.c.l.b16 %v1261
        %v1351 = vunpack.c.h.b16 %v1261
        %v1352 = vunpack.c.l.b16 %v1262
        %v1353 = vunpack.c.h.b16 %v1262
        %v1354 = vunpack.c.l.b16 %v1263
        %v1355 = vunpack.c.h.b16 %v1263
        %v1356 = vunpack.c.l.b16 %v1264
        %v1357 = vunpack.c.h.b16 %v1264
        %v1358 = vunpack.c.l.b16 %v1265
        %v1359 = vunpack.c.h.b16 %v1265
        %v1360 = vunpack.c.l.b16 %v1266
        %v1361 = vunpack.c.h.b16 %v1266
        %v1362 = vunpack.c.l.b16 %v1267
        %v1363 = vunpack.c.h.b16 %v1267
        %v1364 = vpack.c.b16 %v1304, %v1300
        %v1365 = vpack.c.b16 %v1305, %v1301
        %v1366 = vpack.c.b16 %v1306, %v1302
        %v1367 = vpack.c.b16 %v1307, %v1303
        %v1368 = vpack.c.b16 %v1312, %v1308
        %v1369 = vpack.c.b16 %v1313, %v1309
        %v1370 = vpack.c.b16 %v1314, %v1310
        %v1371 = vpack.c.b16 %v1315, %v1311
        %v1372 = vpack.c.b16 %v1320, %v1316
        %v1373 = vpack.c.b16 %v1321, %v1317
        %v1374 = vpack.c.b16 %v1322, %v1318
        %v1375 = vpack.c.b16 %v1323, %v1319
        %v1376 = vpack.c.b16 %v1328, %v1324
        %v1377 = vpack.c.b16 %v1329, %v1325
        %v1378 = vpack.c.b16 %v1330, %v1326
        %v1379 = vpack.c.b16 %v1331, %v1327
        %v1380 = vpack.c.b16 %v1336, %v1332
        %v1381 = vpack.c.b16 %v1337, %v1333
        %v1382 = vpack.c.b16 %v1338, %v1334
        %v1383 = vpack.c.b16 %v1339, %v1335
        %v1384 = vpack.c.b16 %v1344, %v1340
        %v1385 = vpack.c.b16 %v1345, %v1341
        %v1386 = vpack.c.b16 %v1346, %v1342
        %v1387 = vpack.c.b16 %v1347, %v1343
        %v1388 = vpack.c.b16 %v1352, %v1348
        %v1389 = vpack.c.b16 %v1353, %v1349
        %v1390 = vpack.c.b16 %v1354, %v1350
        %v1391 = vpack.c.b16 %v1355, %v1351
        %v1392 = vpack.c.b16 %v1360, %v1356
        %v1393 = vpack.c.b16 %v1361, %v1357
        %v1394 = vpack.c.b16 %v1362, %v1358
        %v1395 = vpack.c.b16 %v1363, %v1359
        %1428 = vmatprep.subr.bf16.mxu0 %v1393
        %1429 = vmatpush1.bf16.msra.mxu0 %v1392
        %1430 = vmatprep.subr.bf16.mxu0 %v1389
        %1431 = vmatpush1.bf16.msra.mxu0 %v1388
        %1432 = vmatprep.subr.bf16.mxu0 %v1385
        %1433 = vmatpush1.bf16.msra.mxu0 %v1384
        %1434 = vmatprep.subr.bf16.mxu0 %v1381
        %1435 = vmatpush1.bf16.msra.mxu0 %v1380
        %1436 = vmatprep.subr.bf16.mxu0 %v1377
        %1437 = vmatpush1.bf16.msra.mxu0 %v1376
        %1438 = vmatprep.subr.bf16.mxu0 %v1373
        %1439 = vmatpush1.bf16.msra.mxu0 %v1372
        %1440 = vmatprep.subr.bf16.mxu0 %v1369
        %1441 = vmatpush1.bf16.msra.mxu0 %v1368
        %1442 = vmatprep.subr.bf16.mxu0 %v1365
        %1443 = vmatpush1.bf16.msra.mxu0 %v1364
        %1444 = vmatprep.subr.bf16.mxu0 0
        %1445 = vmatpush2.bf16.msra.mxu0 0
        %1446 = vmatprep.subr.bf16.mxu0 0
        %1447 = vmatpush2.bf16.msra.mxu0 0
        %1448 = vmatprep.subr.bf16.mxu0 0
        %1449 = vmatpush2.bf16.msra.mxu0 0
        %1450 = vmatprep.subr.bf16.mxu0 0
        %1451 = vmatpush2.bf16.msra.mxu0 0
        %1452 = vmatprep.subr.bf16.mxu0 0
        %1453 = vmatpush2.bf16.msra.mxu0 0
        %1454 = vmatprep.subr.bf16.mxu0 0
        %1455 = vmatpush2.bf16.msra.mxu0 0
        %1456 = vmatprep.subr.bf16.mxu0 0
        %1457 = vmatpush2.bf16.msra.mxu0 0
        %1458 = vmatprep.subr.bf16.mxu0 0
        %1459 = vmatpush2.bf16.msra.mxu0 0
        %1460 = vmatprep.mubr.bf16.mxu0 0
        %1461 = vmatmul.mubr.bf16.gmra.mxu0 %v1235
        %v1462 = vpop.f32.mrf.mxu0
        %v1463 = vadd.f32 0.0, %v1462
        %v1464 = vpop.f32.mrf.mxu0
        %v1465 = vadd.f32 0.0, %v1464
        %v1466 = vpop.f32.mrf.mxu0
        %v1467 = vpop.f32.mrf.mxu0
        %1468 = vdwg.mxu0
        %1469 = vmatprep.subr.bf16.mxu0 %v1395
        %1470 = vmatpush1.bf16.msra.mxu0 %v1394
        %1471 = vmatprep.subr.bf16.mxu0 %v1391
        %1472 = vmatpush1.bf16.msra.mxu0 %v1390
        %1473 = vmatprep.subr.bf16.mxu0 %v1387
        %1474 = vmatpush1.bf16.msra.mxu0 %v1386
        %1475 = vmatprep.subr.bf16.mxu0 %v1383
        %1476 = vmatpush1.bf16.msra.mxu0 %v1382
        %1477 = vmatprep.subr.bf16.mxu0 %v1379
        %1478 = vmatpush1.bf16.msra.mxu0 %v1378
        %1479 = vmatprep.subr.bf16.mxu0 %v1375
        %1480 = vmatpush1.bf16.msra.mxu0 %v1374
        %1481 = vmatprep.subr.bf16.mxu0 %v1371
        %1482 = vmatpush1.bf16.msra.mxu0 %v1370
        %1483 = vmatprep.subr.bf16.mxu0 %v1367
        %1484 = vmatpush1.bf16.msra.mxu0 %v1366
        %1485 = vmatprep.subr.bf16.mxu0 0
        %1486 = vmatpush2.bf16.msra.mxu0 0
        %1487 = vmatprep.subr.bf16.mxu0 0
        %1488 = vmatpush2.bf16.msra.mxu0 0
        %1489 = vmatprep.subr.bf16.mxu0 0
        %1490 = vmatpush2.bf16.msra.mxu0 0
        %1491 = vmatprep.subr.bf16.mxu0 0
        %1492 = vmatpush2.bf16.msra.mxu0 0
        %1493 = vmatprep.subr.bf16.mxu0 0
        %1494 = vmatpush2.bf16.msra.mxu0 0
        %1495 = vmatprep.subr.bf16.mxu0 0
        %1496 = vmatpush2.bf16.msra.mxu0 0
        %1497 = vmatprep.subr.bf16.mxu0 0
        %1498 = vmatpush2.bf16.msra.mxu0 0
        %1499 = vmatprep.subr.bf16.mxu0 0
        %1500 = vmatpush2.bf16.msra.mxu0 0
        %1501 = vmatprep.mubr.bf16.mxu0 0
        %1502 = vmatmul.mubr.bf16.gmra.mxu0 %v1235
        %v1503 = vpop.f32.mrf.mxu0
        %v1504 = vadd.f32 0.0, %v1503
        %v1505 = vpop.f32.mrf.mxu0
        %v1506 = vadd.f32 0.0, %v1505
        %v1507 = vpop.f32.mrf.mxu0
        %v1508 = vpop.f32.mrf.mxu0
        %1509 = vdwg.mxu0
        %v1510 = vadd.f32 %v1231, %v1463
        %v1511 = vadd.f32 %v1232, %v1465
        %v1512 = vadd.f32 %v1233, %v1504
        %v1513 = vadd.f32 %v1234, %v1506
        %v1514 = vxor.u32 %v1510, 2147483648
        %v1515 = vmul.f32 %v1514, 1.442695
        %v1516 = vpow.pop %v1515
        %v1517 = vadd.f32 %v1516, 1.0
        %v1518 = vrcp.pop %v1517
        %v1519 = vmul.f32 1.0, %v1518
        %v1520 = vxor.u32 %v1511, 2147483648
        %v1521 = vmul.f32 %v1520, 1.442695
        %v1522 = vpow.pop %v1521
        %v1523 = vadd.f32 %v1522, 1.0
        %v1524 = vrcp.pop %v1523
        %v1525 = vmul.f32 1.0, %v1524
        %v1526 = vtanh.pop %v1512
        %v1527 = vxor.u32 %v1513, 2147483648
        %v1528 = vmul.f32 %v1527, 1.442695
        %v1529 = vpow.pop %v1528
        %v1530 = vadd.f32 %v1529, 1.0
        %v1531 = vrcp.pop %v1530
        %v1532 = vmul.f32 1.0, %v1531
        %v1533 = vmul.f32 %v1525, %v1227
        %v1534 = vmul.f32 %v1519, %v1526
        %v1535 = vadd.f32 %v1533, %v1534
        %v1536 = vtanh.pop %v1535
        %v1537 = vmul.f32 %v1532, %v1536
        %s1538 = sadd.s32 %s578, 2
        %v1539 = vstv %s1538
        %vm1540 = vcmp.lt.s32.totalorder %v1539, %v577
        %v1541 = vsel %vm1540, 1, 0
        %1542 = vset.pattern.permute.xlu0 0
        %1543 = vperm.xlu0 %1542, %v1541
        %v1544 = vpop.permute.xlu0 %1543
        %vm1545 = vcmp.eq.s32.totalorder %v1544, 1
        %v1546 = vsel %vm1545, %v1537, %v1226
        %1547 = vst [vmem:[#allocation3] sm:$0xff] %v1546
        %v1548 = vsel %vm1545, %v1535, %v1227
        %1549 = vst [vmem:[#allocation4] sm:$0xff] %v1548
        %v1550 = vld [vmem:[#allocation3] sm:$0xff]
        %v1551 = vld [vmem:[#allocation4] sm:$0xff]
        %s1552 = smul.u32 3, 4
        %s1553 = smul.addr %s1552, 8
        %s1554 = scalar_lea.vmem [#allocation2], %s1553
        %v1555 = vld [vmem:[%s1554] sm:$0xff]
        %v1556 = vld [vmem:[%s1554 + $0x8] sm:$0xff]
        %v1557 = vld [vmem:[%s1554 + $0x10] sm:$0xff]
        %v1558 = vld [vmem:[%s1554 + $0x18] sm:$0xff]
        %v1559 = vpack.c.bf16 %v1550, %v1550
        %v1560 = vld [vmem:[#allocation8] sm:$0xff]
        %v1561 = vld [vmem:[#allocation8 + $0x8] sm:$0xff]
        %v1562 = vld [vmem:[#allocation8 + $0x10] sm:$0xff]
        %v1563 = vld [vmem:[#allocation8 + $0x18] sm:$0xff]
        %v1564 = vld [vmem:[#allocation8 + $0x20] sm:$0xff]
        %v1565 = vld [vmem:[#allocation8 + $0x28] sm:$0xff]
        %v1566 = vld [vmem:[#allocation8 + $0x30] sm:$0xff]
        %v1567 = vld [vmem:[#allocation8 + $0x38] sm:$0xff]
        %v1568 = vld [vmem:[#allocation8 + $0x40] sm:$0xff]
        %v1569 = vld [vmem:[#allocation8 + $0x48] sm:$0xff]
        %v1570 = vld [vmem:[#allocation8 + $0x50] sm:$0xff]
        %v1571 = vld [vmem:[#allocation8 + $0x58] sm:$0xff]
        %v1572 = vld [vmem:[#allocation8 + $0x60] sm:$0xff]
        %v1573 = vld [vmem:[#allocation8 + $0x68] sm:$0xff]
        %v1574 = vld [vmem:[#allocation8 + $0x70] sm:$0xff]
        %v1575 = vld [vmem:[#allocation8 + $0x78] sm:$0xff]
        %v1576 = vld [vmem:[#allocation8 + $0x80] sm:$0xff]
        %v1577 = vld [vmem:[#allocation8 + $0x88] sm:$0xff]
        %v1578 = vld [vmem:[#allocation8 + $0x90] sm:$0xff]
        %v1579 = vld [vmem:[#allocation8 + $0x98] sm:$0xff]
        %v1580 = vld [vmem:[#allocation8 + $0xa0] sm:$0xff]
        %v1581 = vld [vmem:[#allocation8 + $0xa8] sm:$0xff]
        %v1582 = vld [vmem:[#allocation8 + $0xb0] sm:$0xff]
        %v1583 = vld [vmem:[#allocation8 + $0xb8] sm:$0xff]
        %v1584 = vld [vmem:[#allocation8 + $0xc0] sm:$0xff]
        %v1585 = vld [vmem:[#allocation8 + $0xc8] sm:$0xff]
        %v1586 = vld [vmem:[#allocation8 + $0xd0] sm:$0xff]
        %v1587 = vld [vmem:[#allocation8 + $0xd8] sm:$0xff]
        %v1588 = vld [vmem:[#allocation8 + $0xe0] sm:$0xff]
        %v1589 = vld [vmem:[#allocation8 + $0xe8] sm:$0xff]
        %v1590 = vld [vmem:[#allocation8 + $0xf0] sm:$0xff]
        %v1591 = vld [vmem:[#allocation8 + $0xf8] sm:$0xff]
        %v1624 = vunpack.c.l.b16 %v1560
        %v1625 = vunpack.c.h.b16 %v1560
        %v1626 = vunpack.c.l.b16 %v1561
        %v1627 = vunpack.c.h.b16 %v1561
        %v1628 = vunpack.c.l.b16 %v1562
        %v1629 = vunpack.c.h.b16 %v1562
        %v1630 = vunpack.c.l.b16 %v1563
        %v1631 = vunpack.c.h.b16 %v1563
        %v1632 = vunpack.c.l.b16 %v1564
        %v1633 = vunpack.c.h.b16 %v1564
        %v1634 = vunpack.c.l.b16 %v1565
        %v1635 = vunpack.c.h.b16 %v1565
        %v1636 = vunpack.c.l.b16 %v1566
        %v1637 = vunpack.c.h.b16 %v1566
        %v1638 = vunpack.c.l.b16 %v1567
        %v1639 = vunpack.c.h.b16 %v1567
        %v1640 = vunpack.c.l.b16 %v1568
        %v1641 = vunpack.c.h.b16 %v1568
        %v1642 = vunpack.c.l.b16 %v1569
        %v1643 = vunpack.c.h.b16 %v1569
        %v1644 = vunpack.c.l.b16 %v1570
        %v1645 = vunpack.c.h.b16 %v1570
        %v1646 = vunpack.c.l.b16 %v1571
        %v1647 = vunpack.c.h.b16 %v1571
        %v1648 = vunpack.c.l.b16 %v1572
        %v1649 = vunpack.c.h.b16 %v1572
        %v1650 = vunpack.c.l.b16 %v1573
        %v1651 = vunpack.c.h.b16 %v1573
        %v1652 = vunpack.c.l.b16 %v1574
        %v1653 = vunpack.c.h.b16 %v1574
        %v1654 = vunpack.c.l.b16 %v1575
        %v1655 = vunpack.c.h.b16 %v1575
        %v1656 = vunpack.c.l.b16 %v1576
        %v1657 = vunpack.c.h.b16 %v1576
        %v1658 = vunpack.c.l.b16 %v1577
        %v1659 = vunpack.c.h.b16 %v1577
        %v1660 = vunpack.c.l.b16 %v1578
        %v1661 = vunpack.c.h.b16 %v1578
        %v1662 = vunpack.c.l.b16 %v1579
        %v1663 = vunpack.c.h.b16 %v1579
        %v1664 = vunpack.c.l.b16 %v1580
        %v1665 = vunpack.c.h.b16 %v1580
        %v1666 = vunpack.c.l.b16 %v1581
        %v1667 = vunpack.c.h.b16 %v1581
        %v1668 = vunpack.c.l.b16 %v1582
        %v1669 = vunpack.c.h.b16 %v1582
        %v1670 = vunpack.c.l.b16 %v1583
        %v1671 = vunpack.c.h.b16 %v1583
        %v1672 = vunpack.c.l.b16 %v1584
        %v1673 = vunpack.c.h.b16 %v1584
        %v1674 = vunpack.c.l.b16 %v1585
        %v1675 = vunpack.c.h.b16 %v1585
        %v1676 = vunpack.c.l.b16 %v1586
        %v1677 = vunpack.c.h.b16 %v1586
        %v1678 = vunpack.c.l.b16 %v1587
        %v1679 = vunpack.c.h.b16 %v1587
        %v1680 = vunpack.c.l.b16 %v1588
        %v1681 = vunpack.c.h.b16 %v1588
        %v1682 = vunpack.c.l.b16 %v1589
        %v1683 = vunpack.c.h.b16 %v1589
        %v1684 = vunpack.c.l.b16 %v1590
        %v1685 = vunpack.c.h.b16 %v1590
        %v1686 = vunpack.c.l.b16 %v1591
        %v1687 = vunpack.c.h.b16 %v1591
        %v1688 = vpack.c.b16 %v1628, %v1624
        %v1689 = vpack.c.b16 %v1629, %v1625
        %v1690 = vpack.c.b16 %v1630, %v1626
        %v1691 = vpack.c.b16 %v1631, %v1627
        %v1692 = vpack.c.b16 %v1636, %v1632
        %v1693 = vpack.c.b16 %v1637, %v1633
        %v1694 = vpack.c.b16 %v1638, %v1634
        %v1695 = vpack.c.b16 %v1639, %v1635
        %v1696 = vpack.c.b16 %v1644, %v1640
        %v1697 = vpack.c.b16 %v1645, %v1641
        %v1698 = vpack.c.b16 %v1646, %v1642
        %v1699 = vpack.c.b16 %v1647, %v1643
        %v1700 = vpack.c.b16 %v1652, %v1648
        %v1701 = vpack.c.b16 %v1653, %v1649
        %v1702 = vpack.c.b16 %v1654, %v1650
        %v1703 = vpack.c.b16 %v1655, %v1651
        %v1704 = vpack.c.b16 %v1660, %v1656
        %v1705 = vpack.c.b16 %v1661, %v1657
        %v1706 = vpack.c.b16 %v1662, %v1658
        %v1707 = vpack.c.b16 %v1663, %v1659
        %v1708 = vpack.c.b16 %v1668, %v1664
        %v1709 = vpack.c.b16 %v1669, %v1665
        %v1710 = vpack.c.b16 %v1670, %v1666
        %v1711 = vpack.c.b16 %v1671, %v1667
        %v1712 = vpack.c.b16 %v1676, %v1672
        %v1713 = vpack.c.b16 %v1677, %v1673
        %v1714 = vpack.c.b16 %v1678, %v1674
        %v1715 = vpack.c.b16 %v1679, %v1675
        %v1716 = vpack.c.b16 %v1684, %v1680
        %v1717 = vpack.c.b16 %v1685, %v1681
        %v1718 = vpack.c.b16 %v1686, %v1682
        %v1719 = vpack.c.b16 %v1687, %v1683
        %1752 = vmatprep.subr.bf16.mxu0 %v1717
        %1753 = vmatpush1.bf16.msra.mxu0 %v1716
        %1754 = vmatprep.subr.bf16.mxu0 %v1713
        %1755 = vmatpush1.bf16.msra.mxu0 %v1712
        %1756 = vmatprep.subr.bf16.mxu0 %v1709
        %1757 = vmatpush1.bf16.msra.mxu0 %v1708
        %1758 = vmatprep.subr.bf16.mxu0 %v1705
        %1759 = vmatpush1.bf16.msra.mxu0 %v1704
        %1760 = vmatprep.subr.bf16.mxu0 %v1701
        %1761 = vmatpush1.bf16.msra.mxu0 %v1700
        %1762 = vmatprep.subr.bf16.mxu0 %v1697
        %1763 = vmatpush1.bf16.msra.mxu0 %v1696
        %1764 = vmatprep.subr.bf16.mxu0 %v1693
        %1765 = vmatpush1.bf16.msra.mxu0 %v1692
        %1766 = vmatprep.subr.bf16.mxu0 %v1689
        %1767 = vmatpush1.bf16.msra.mxu0 %v1688
        %1768 = vmatprep.subr.bf16.mxu0 0
        %1769 = vmatpush2.bf16.msra.mxu0 0
        %1770 = vmatprep.subr.bf16.mxu0 0
        %1771 = vmatpush2.bf16.msra.mxu0 0
        %1772 = vmatprep.subr.bf16.mxu0 0
        %1773 = vmatpush2.bf16.msra.mxu0 0
        %1774 = vmatprep.subr.bf16.mxu0 0
        %1775 = vmatpush2.bf16.msra.mxu0 0
        %1776 = vmatprep.subr.bf16.mxu0 0
        %1777 = vmatpush2.bf16.msra.mxu0 0
        %1778 = vmatprep.subr.bf16.mxu0 0
        %1779 = vmatpush2.bf16.msra.mxu0 0
        %1780 = vmatprep.subr.bf16.mxu0 0
        %1781 = vmatpush2.bf16.msra.mxu0 0
        %1782 = vmatprep.subr.bf16.mxu0 0
        %1783 = vmatpush2.bf16.msra.mxu0 0
        %1784 = vmatprep.mubr.bf16.mxu0 0
        %1785 = vmatmul.mubr.bf16.gmra.mxu0 %v1559
        %v1786 = vpop.f32.mrf.mxu0
        %v1787 = vadd.f32 0.0, %v1786
        %v1788 = vpop.f32.mrf.mxu0
        %v1789 = vadd.f32 0.0, %v1788
        %v1790 = vpop.f32.mrf.mxu0
        %v1791 = vpop.f32.mrf.mxu0
        %1792 = vdwg.mxu0
        %1793 = vmatprep.subr.bf16.mxu0 %v1719
        %1794 = vmatpush1.bf16.msra.mxu0 %v1718
        %1795 = vmatprep.subr.bf16.mxu0 %v1715
        %1796 = vmatpush1.bf16.msra.mxu0 %v1714
        %1797 = vmatprep.subr.bf16.mxu0 %v1711
        %1798 = vmatpush1.bf16.msra.mxu0 %v1710
        %1799 = vmatprep.subr.bf16.mxu0 %v1707
        %1800 = vmatpush1.bf16.msra.mxu0 %v1706
        %1801 = vmatprep.subr.bf16.mxu0 %v1703
        %1802 = vmatpush1.bf16.msra.mxu0 %v1702
        %1803 = vmatprep.subr.bf16.mxu0 %v1699
        %1804 = vmatpush1.bf16.msra.mxu0 %v1698
        %1805 = vmatprep.subr.bf16.mxu0 %v1695
        %1806 = vmatpush1.bf16.msra.mxu0 %v1694
        %1807 = vmatprep.subr.bf16.mxu0 %v1691
        %1808 = vmatpush1.bf16.msra.mxu0 %v1690
        %1809 = vmatprep.subr.bf16.mxu0 0
        %1810 = vmatpush2.bf16.msra.mxu0 0
        %1811 = vmatprep.subr.bf16.mxu0 0
        %1812 = vmatpush2.bf16.msra.mxu0 0
        %1813 = vmatprep.subr.bf16.mxu0 0
        %1814 = vmatpush2.bf16.msra.mxu0 0
        %1815 = vmatprep.subr.bf16.mxu0 0
        %1816 = vmatpush2.bf16.msra.mxu0 0
        %1817 = vmatprep.subr.bf16.mxu0 0
        %1818 = vmatpush2.bf16.msra.mxu0 0
        %1819 = vmatprep.subr.bf16.mxu0 0
        %1820 = vmatpush2.bf16.msra.mxu0 0
        %1821 = vmatprep.subr.bf16.mxu0 0
        %1822 = vmatpush2.bf16.msra.mxu0 0
        %1823 = vmatprep.subr.bf16.mxu0 0
        %1824 = vmatpush2.bf16.msra.mxu0 0
        %1825 = vmatprep.mubr.bf16.mxu0 0
        %1826 = vmatmul.mubr.bf16.gmra.mxu0 %v1559
        %v1827 = vpop.f32.mrf.mxu0
        %v1828 = vadd.f32 0.0, %v1827
        %v1829 = vpop.f32.mrf.mxu0
        %v1830 = vadd.f32 0.0, %v1829
        %v1831 = vpop.f32.mrf.mxu0
        %v1832 = vpop.f32.mrf.mxu0
        %1833 = vdwg.mxu0
        %v1834 = vadd.f32 %v1555, %v1787
        %v1835 = vadd.f32 %v1556, %v1789
        %v1836 = vadd.f32 %v1557, %v1828
        %v1837 = vadd.f32 %v1558, %v1830
        %v1838 = vxor.u32 %v1834, 2147483648
        %v1839 = vmul.f32 %v1838, 1.442695
        %v1840 = vpow.pop %v1839
        %v1841 = vadd.f32 %v1840, 1.0
        %v1842 = vrcp.pop %v1841
        %v1843 = vmul.f32 1.0, %v1842
        %v1844 = vxor.u32 %v1835, 2147483648
        %v1845 = vmul.f32 %v1844, 1.442695
        %v1846 = vpow.pop %v1845
        %v1847 = vadd.f32 %v1846, 1.0
        %v1848 = vrcp.pop %v1847
        %v1849 = vmul.f32 1.0, %v1848
        %v1850 = vtanh.pop %v1836
        %v1851 = vxor.u32 %v1837, 2147483648
        %v1852 = vmul.f32 %v1851, 1.442695
        %v1853 = vpow.pop %v1852
        %v1854 = vadd.f32 %v1853, 1.0
        %v1855 = vrcp.pop %v1854
        %v1856 = vmul.f32 1.0, %v1855
        %v1857 = vmul.f32 %v1849, %v1551
        %v1858 = vmul.f32 %v1843, %v1850
        %v1859 = vadd.f32 %v1857, %v1858
        %v1860 = vtanh.pop %v1859
        %v1861 = vmul.f32 %v1856, %v1860
        %s1862 = sadd.s32 %s578, 3
        %v1863 = vstv %s1862
        %vm1864 = vcmp.lt.s32.totalorder %v1863, %v577
        %v1865 = vsel %vm1864, 1, 0
        %1866 = vset.pattern.permute.xlu0 0
        %1867 = vperm.xlu0 %1866, %v1865
        %v1868 = vpop.permute.xlu0 %1867
        %vm1869 = vcmp.eq.s32.totalorder %v1868, 1
        %v1870 = vsel %vm1869, %v1861, %v1550
        %1871 = vst [vmem:[#allocation3] sm:$0xff] %v1870
        %v1872 = vsel %vm1869, %v1859, %v1551
        %1873 = vst [vmem:[#allocation4] sm:$0xff] %v1872
        %p1874 = scmp.eq.s32.totalorder %s26, 1
        // Predicated region
        $region65: #{tpu_custom_call.1} parent=47 // pred_check
          %p1875 = pneg %p1874
        $region66: #{tpu_custom_call.1} parent=47 // pred_check_branch
          %1877 = sbr.rel (%p1875) target = $region68
        $region67: #{tpu_custom_call.1} parent=47 // pred_region
          %v1878 = vld [vmem:[#allocation3] sm:$0xff]
          %v1879 = vpack.c.bf16 %v1878, %v1878
          %v1880 = vld [vmem:[%s5] sm:$0xf]
          %v1881 = vld [vmem:[%s5 + $0x4] sm:$0xf]
          %v1882 = vld [vmem:[%s5 + $0x8] sm:$0xf]
          %v1883 = vld [vmem:[%s5 + $0xc] sm:$0xf]
          %v1884 = vld [vmem:[%s5 + $0x10] sm:$0xf]
          %v1885 = vld [vmem:[%s5 + $0x14] sm:$0xf]
          %v1886 = vld [vmem:[%s5 + $0x18] sm:$0xf]
          %v1887 = vld [vmem:[%s5 + $0x1c] sm:$0xf]
          %v1888 = vld [vmem:[%s5 + $0x20] sm:$0xf]
          %v1889 = vld [vmem:[%s5 + $0x24] sm:$0xf]
          %v1890 = vld [vmem:[%s5 + $0x28] sm:$0xf]
          %v1891 = vld [vmem:[%s5 + $0x2c] sm:$0xf]
          %v1892 = vld [vmem:[%s5 + $0x30] sm:$0xf]
          %v1893 = vld [vmem:[%s5 + $0x34] sm:$0xf]
          %v1894 = vld [vmem:[%s5 + $0x38] sm:$0xf]
          %v1895 = vld [vmem:[%s5 + $0x3c] sm:$0xf]
          %v1896 = vld [vmem:[%s6] sm:$0x1]
          %v1898 = vlaneseq
          %v1899 = vshrl.u32 %v1898, 7
          %v1900 = vsub.s32 0, %v1899
          %v1901 = vrot.slane %v1896, %v1900
          %v1919 = vunpack.c.l.b16 %v1880
          %v1920 = vunpack.c.l.b16 %v1881
          %v1921 = vunpack.c.l.b16 %v1882
          %v1922 = vunpack.c.l.b16 %v1883
          %v1923 = vunpack.c.l.b16 %v1884
          %v1924 = vunpack.c.l.b16 %v1885
          %v1925 = vunpack.c.l.b16 %v1886
          %v1926 = vunpack.c.l.b16 %v1887
          %v1927 = vunpack.c.l.b16 %v1888
          %v1928 = vunpack.c.l.b16 %v1889
          %v1929 = vunpack.c.l.b16 %v1890
          %v1930 = vunpack.c.l.b16 %v1891
          %v1931 = vunpack.c.l.b16 %v1892
          %v1932 = vunpack.c.l.b16 %v1893
          %v1933 = vunpack.c.l.b16 %v1894
          %v1934 = vunpack.c.l.b16 %v1895
          %v1935 = vpack.c.b16 %v1920, %v1919
          %v1936 = vpack.c.b16 %v1922, %v1921
          %v1937 = vpack.c.b16 %v1924, %v1923
          %v1938 = vpack.c.b16 %v1926, %v1925
          %v1939 = vpack.c.b16 %v1928, %v1927
          %v1940 = vpack.c.b16 %v1930, %v1929
          %v1941 = vpack.c.b16 %v1932, %v1931
          %v1942 = vpack.c.b16 %v1934, %v1933
          %1951 = vmatprep.subr.bf16.mxu0 0
          %1952 = vmatpush1.bf16.msra.mxu0 %v1942
          %1953 = vmatprep.subr.bf16.mxu0 0
          %1954 = vmatpush1.bf16.msra.mxu0 %v1941
          %1955 = vmatprep.subr.bf16.mxu0 0
          %1956 = vmatpush1.bf16.msra.mxu0 %v1940
          %1957 = vmatprep.subr.bf16.mxu0 0
          %1958 = vmatpush1.bf16.msra.mxu0 %v1939
          %1959 = vmatprep.subr.bf16.mxu0 0
          %1960 = vmatpush1.bf16.msra.mxu0 %v1938
          %1961 = vmatprep.subr.bf16.mxu0 0
          %1962 = vmatpush1.bf16.msra.mxu0 %v1937
          %1963 = vmatprep.subr.bf16.mxu0 0
          %1964 = vmatpush1.bf16.msra.mxu0 %v1936
          %1965 = vmatprep.subr.bf16.mxu0 0
          %1966 = vmatpush1.bf16.msra.mxu0 %v1935
          %1967 = vmatprep.subr.bf16.mxu0 0
          %1968 = vmatpush2.bf16.msra.mxu0 0
          %1969 = vmatprep.subr.bf16.mxu0 0
          %1970 = vmatpush2.bf16.msra.mxu0 0
          %1971 = vmatprep.subr.bf16.mxu0 0
          %1972 = vmatpush2.bf16.msra.mxu0 0
          %1973 = vmatprep.subr.bf16.mxu0 0
          %1974 = vmatpush2.bf16.msra.mxu0 0
          %1975 = vmatprep.subr.bf16.mxu0 0
          %1976 = vmatpush2.bf16.msra.mxu0 0
          %1977 = vmatprep.subr.bf16.mxu0 0
          %1978 = vmatpush2.bf16.msra.mxu0 0
          %1979 = vmatprep.subr.bf16.mxu0 0
          %1980 = vmatpush2.bf16.msra.mxu0 0
          %1981 = vmatprep.subr.bf16.mxu0 0
          %1982 = vmatpush2.bf16.msra.mxu0 0
          %1983 = vmatprep.mubr.bf16.mxu0 0
          %1984 = vmatmul.mubr.bf16.gmra.mxu0 %v1879
          %v1985 = vpop.f32.mrf.mxu0
          %v1986 = vadd.f32 %v1901, %v1985
          %v1987 = vpop.f32.mrf.mxu0
          %v1988 = vpop.f32.mrf.mxu0
          %v1989 = vpop.f32.mrf.mxu0
          %1990 = vdwg.mxu0
          %1991 = vst [vmem:[#allocation11] sm:$0xff] %v1986
        $region68: #{tpu_custom_call.1} parent=47 // pred_fallthru
          _
        // Predicated region
        $region69: #{tpu_custom_call.1} parent=47 // pred_check
          %p1992 = pneg %p210
        $region70: #{tpu_custom_call.1} parent=47 // pred_check_branch
          %1994 = sbr.rel (%p1992) target = $region72
        $region71: #{tpu_custom_call.1} parent=47 // pred_region
          %s1996 = ssub.s32 128, 128
          %1997 = vsyncadd [#allocation7], %s1996
          %s1998 = smul.addr %s25, 128
          %s1999 = scalar_lea.hbm %s7, %s1998
          %s2001 = sshll.u32 [#allocation11], 4
          %s2002 = int_to_ptr.vmem [resolvable:$true] %s2001
          %2004 = dma.vmem_to_hbm [thread:$0]  %s2002, 128, %s1999, [#allocation7]
        $region72: #{tpu_custom_call.1} parent=47 // pred_fallthru
          _
        // Predicated region
        $region73: #{tpu_custom_call.1} parent=47 // pred_check
          %p2005 = pneg %p210
        $region74: #{tpu_custom_call.1} parent=47 // pred_check_branch
          %2007 = sbr.rel (%p2005) target = $region76
        $region75: #{tpu_custom_call.1} parent=47 // pred_region
          %2008 = dma.done [#allocation7], 128
        $region76: #{tpu_custom_call.1} parent=47 // pred_fallthru
          _
      $region48: #{tpu_custom_call.1} parent=5 // pred_fallthru
        _
      %p2009 = scmp.le.s32.totalorder 2, %s16
      // Predicated region
      $region77: #{tpu_custom_call.1} parent=5 // pred_check
        %p2010 = pneg %p2009
      $region78: #{tpu_custom_call.1} parent=5 // pred_check_branch
        %2012 = sbr.rel (%p2010) target = $region80
      $region79: #{tpu_custom_call.1} parent=5 // pred_region
        %s2013 = ssub.s32 %s16, 2
      $region80: #{tpu_custom_call.1} parent=5 // pred_fallthru
        _
    $region6: #{tpu_custom_call.1} parent=1 // loop_footer
      %s20 = sadd.s32 1, %s16
    $region7: #{tpu_custom_call.1} parent=1 // loop_footer_branch
      %15 = sbr.rel target = $region3
    $region8: #{tpu_custom_call.1} parent=1 // loop_exit
      _
    %2014 = vsyncpa [#allocation6], 1
    %s2015 = scalar_lea.sflag [#allocation6], 1
    %2016 = vsyncpa %s2015, 1
    %2017 = vsyncpa [#allocation9], 1
    %2018 = vsyncpa [#allocation7], 1
    %s2019 = scalar_lea.sflag [#allocation7], 1
    %2020 = vsyncpa %s2019, 1

</llo_original>
